<compile_context>
chip_gen: v7x
topology: tpu7x:2x2x1
jax: 0.10.0
libtpu: 0.0.40
codegen_flags: <defaults>
</compile_context>

<pallas_src>
import jax
import jax.numpy as jnp
from jax import lax
from jax.experimental import pallas as pl
from jax.experimental.pallas import tpu as pltpu

# Model hyperparameters (small, consistent with the module's forward)
INPUT_D = 16
HIDDEN_D = 32
LAYER_D = 2
OUTPUT_D = 10
BATCH = 2
SEQ = 8

BP = 8          # padded batch (one full sublane group)
OUT_PAD = 128   # lane-dense padded FC output width


def _round8(n):
    return ((n + 7) // 8) * 8


def _slab_layout(D, H):
    """Row offsets of each constant inside the packed weight slab (all 8-aligned)."""
    r_wih0 = 0                      # (D, 8H)   layer-0 input weights, scattered
    r_wc = _round8(D)               # (2H, 8H)  block-diagonal recurrent weights
    r_b0 = r_wc + 2 * H             # (8, 8H)   layer-0 bias, pre-broadcast to BP rows
    r_b1 = r_b0 + 8                 # (8, 8H)   layer-1 bias, pre-broadcast to BP rows
    r_wfc = r_b1 + 8                # (H, 8H)   FC weight (cols 0:OUT_PAD used)
    r_bfc = r_wfc + _round8(H)      # (8, 8H)   FC bias, pre-broadcast (cols 0:OUT_PAD)
    total = r_bfc + 8
    return r_wih0, r_wc, r_b0, r_b1, r_wfc, r_bfc, total


def _make_kernel(T, Bp, D, H):
    """Kernel with static shape constants baked in."""
    H2, H8 = 2 * H, 8 * H
    r_wih0, r_wc, r_b0, r_b1, r_wfc, r_bfc, _ = _slab_layout(D, H)

    def kernel(x_ref, slab_ref, out_ref, xproj_ref):
        # --- constant views (static, aligned slices of the single slab) -------
        wih0p = slab_ref[r_wih0:r_wih0 + D, :]        # (D,  8H)
        wc = slab_ref[r_wc:r_wc + H2, :]              # (2H, 8H)
        b0p = slab_ref[r_b0:r_b0 + Bp, :]             # (Bp, 8H) layer-0 bias
        b1p = slab_ref[r_b1:r_b1 + Bp, :]             # (Bp, 8H) layer-1 bias

        # --- hoisted layer-0 input projection for ALL timesteps (one GEMM, off
        #     the recurrent critical chain), parked in VMEM scratch -----------
        xproj_ref[...] = jnp.dot(x_ref[...], wih0p,
                                 preferred_element_type=jnp.float32)  # (T*Bp, 8H)

        b01 = b0p + b1p   # hoisted: combined bias for steps 1..T-1

        # packed state: lanes 0:H = layer 0, lanes H:2H = layer 1
        hh = jnp.zeros((Bp, H2), jnp.float32)   # [h0 | h1]
        cc = jnp.zeros((Bp, H2), jnp.float32)   # [c0 | c1]

        # Wavefront over T+1 combined steps (fully unrolled: T is static).
        # Step s: layer-0 timestep s and layer-1 timestep s-1 from ONE GEMM.
        for s in range(T + 1):
            comb = jnp.dot(hh, wc, preferred_element_type=jnp.float32)  # (Bp, 8H)
            if s == 0:
                # layer-1 columns stay exactly 0 -> h1(-1) = c1(-1) = 0 preserved
                gates = comb + (xproj_ref[0:Bp, :] + b0p)
            elif s < T:
                gates = comb + (xproj_ref[s * Bp:(s + 1) * Bp, :] + b01)
            else:
                # last step: only the layer-1 half (timestep T-1) is meaningful
                gates = comb + b1p

            # one sigmoid pass over all 8 gate groups; g-gate columns were
            # pre-scaled by 2 in the wrapper, so tanh(x) == 2*sigmoid(2x) - 1
            z = jax.nn.sigmoid(gates)
            i_g = z[:, 0:H2]                       # [i0 | i1]
            f_g = z[:, H2:2 * H2]                  # [f0 | f1]
            g_g = 2.0 * z[:, 2 * H2:3 * H2] - 1.0  # [g0 | g1] (== tanh)
            o_g = z[:, 3 * H2:4 * H2]              # [o0 | o1]
            cc = f_g * cc + i_g * g_g
            hh = o_g * jnp.tanh(cc)
            # after step s: hh = [h0(s), h1(s-1)], cc = [c0(s), c1(s-1)]

        # fc(out[:, -1, :]) == fc(h1 at the last timestep); 128-lane dense store.
        wfc = slab_ref[r_wfc:r_wfc + H, 0:OUT_PAD]      # (H, 128)
        bfc = slab_ref[r_bfc:r_bfc + Bp, 0:OUT_PAD]     # (Bp, 128)
        out_ref[...] = jnp.dot(hh[:, H:H2], wfc,
                               preferred_element_type=jnp.float32) + bfc

    return kernel


def init_params(key, input_d, hidden_d, layer_d, output_d):
    """PyTorch-style parameter init (uniform +-1/sqrt(H)), PyTorch layouts."""
    scale = 1.0 / float(hidden_d) ** 0.5
    keys = jax.random.split(key, 4 * layer_d + 2)
    idx = 0
    lstm = []
    for l in range(layer_d):
        in_d = input_d if l == 0 else hidden_d
        wih = jax.random.uniform(keys[idx], (4 * hidden_d, in_d),
                                 minval=-scale, maxval=scale, dtype=jnp.float32); idx += 1
        whh = jax.random.uniform(keys[idx], (4 * hidden_d, hidden_d),
                                 minval=-scale, maxval=scale, dtype=jnp.float32); idx += 1
        bih = jax.random.uniform(keys[idx], (4 * hidden_d,),
                                 minval=-scale, maxval=scale, dtype=jnp.float32); idx += 1
        bhh = jax.random.uniform(keys[idx], (4 * hidden_d,),
                                 minval=-scale, maxval=scale, dtype=jnp.float32); idx += 1
        lstm.append((wih, whh, (bih, bhh)))
    wfc = jax.random.uniform(keys[idx], (output_d, hidden_d),
                             minval=-scale, maxval=scale, dtype=jnp.float32); idx += 1
    bfc = jax.random.uniform(keys[idx], (output_d,),
                             minval=-scale, maxval=scale, dtype=jnp.float32)
    return {"lstm": lstm, "fc": (wfc, bfc)}


def prepare_packed_weights(params):
    """Build the single constant weight slab ONCE (outside the per-call path)."""
    (wih0, whh0, (bih0, bhh0)), (wih1, whh1, (bih1, bhh1)) = params["lstm"]
    wfc, bfc = params["fc"]
    H = whh0.shape[1]
    D = wih0.shape[1]
    O = wfc.shape[0]
    H2, H4, H8 = 2 * H, 4 * H, 8 * H
    r_wih0, r_wc, r_b0, r_b1, r_wfc, r_bfc, total = _slab_layout(D, H)

    # Column layout: per-gate interleave [i0,i1 | f0,f1 | g0,g1 | o0,o1], each H wide.
    def scatter_l0(w4h):      # (rows, 4H) in PyTorch [i,f,g,o] order -> layer-0 cols
        out = jnp.zeros((w4h.shape[0], H8), jnp.float32)
        for g in range(4):
            out = out.at[:, (2 * g) * H:(2 * g) * H + H].set(w4h[:, g * H:(g + 1) * H])
        return out

    def scatter_l1(w4h):      # -> layer-1 cols
        out = jnp.zeros((w4h.shape[0], H8), jnp.float32)
        for g in range(4):
            out = out.at[:, (2 * g + 1) * H:(2 * g + 1) * H + H].set(w4h[:, g * H:(g + 1) * H])
        return out

    wih0p = scatter_l0(wih0.T)                                        # (D, 8H)
    wc = jnp.zeros((H2, H8), jnp.float32)
    wc = wc.at[0:H, :].set(scatter_l0(whh0.T) + scatter_l1(wih1.T))   # h0 rows
    wc = wc.at[H:H2, :].set(scatter_l1(whh1.T))                       # h1 rows
    b0p = scatter_l0((bih0 + bhh0).reshape(1, H4))                    # (1, 8H)
    b1p = scatter_l1((bih1 + bhh1).reshape(1, H4))                    # (1, 8H)

    # Single-sigmoid trick: scale g-gate pre-activations (cols 4H:6H) by 2.
    gscale = jnp.ones((H8,), jnp.float32).at[4 * H:6 * H].set(2.0)
    wih0p = wih0p * gscale
    wc = wc * gscale
    b0p = b0p * gscale
    b1p = b1p * gscale

    # FC padded to a lane-dense (H, 128) / (BP, 128) block.
    wfcp = jnp.zeros((H, OUT_PAD), jnp.float32).at[:, :O].set(wfc.T)
    bfcp = jnp.zeros((1, OUT_PAD), jnp.float32).at[:, :O].set(bfc)

    slab = jnp.zeros((total, H8), jnp.float32)
    slab = slab.at[r_wih0:r_wih0 + D, :].set(wih0p)
    slab = slab.at[r_wc:r_wc + H2, :].set(wc)
    slab = slab.at[r_b0:r_b0 + BP, :].set(jnp.broadcast_to(b0p, (BP, H8)))
    slab = slab.at[r_b1:r_b1 + BP, :].set(jnp.broadcast_to(b1p, (BP, H8)))
    slab = slab.at[r_wfc:r_wfc + H, 0:OUT_PAD].set(wfcp)
    slab = slab.at[r_bfc:r_bfc + BP, 0:OUT_PAD].set(jnp.broadcast_to(bfcp, (BP, OUT_PAD)))
    return slab


def lstm_packed_forward(x, slab):
    """x: (B, T, D) float32, batch_first; slab: packed constants from prepare_packed_weights."""
    B, T, D = x.shape
    assert B <= BP, "this demo kernel packs the batch into one sublane group"
    H = HIDDEN_D

    # Pad batch to a full sublane group, go time-major and flatten (T*Bp, D).
    x_p = jnp.zeros((BP, T, D), jnp.float32).at[:B].set(x)
    x_tm = jnp.transpose(x_p, (1, 0, 2)).reshape(T * BP, D)

    vmem = pl.BlockSpec(memory_space=pltpu.MemorySpace.VMEM)
    out_p = pl.pallas_call(
        _make_kernel(T, BP, D, H),
        out_shape=jax.ShapeDtypeStruct((BP, OUT_PAD), jnp.float32),
        in_specs=[vmem, vmem],                 # 2 DMAs total: x + constant slab
        out_specs=vmem,
        scratch_shapes=[pltpu.VMEM((T * BP, 8 * H), jnp.float32)],   # hoisted x-projection
    )(x_tm, slab)
    return out_p[:B, :OUTPUT_D]


def reference_forward(x, params):
    """Pure-JAX reference matching PyTorch nn.LSTM(batch_first=True) + Linear."""
    B, T, D = x.shape
    outs = x
    for (wih, whh, (bih, bhh)) in params["lstm"]:
        Hl = whh.shape[1]
        h0 = jnp.zeros((B, Hl), jnp.float32)
        c0 = jnp.zeros((B, Hl), jnp.float32)

        def step(carry, xt):
            h, c = carry
            g = xt @ wih.T + bih + h @ whh.T + bhh
            i = jax.nn.sigmoid(g[:, :Hl])
            f = jax.nn.sigmoid(g[:, Hl:2 * Hl])
            gg = jnp.tanh(g[:, 2 * Hl:3 * Hl])
            o = jax.nn.sigmoid(g[:, 3 * Hl:])
            c = f * c + i * gg
            h = o * jnp.tanh(c)
            return (h, c), h

        (_, _), seq = lax.scan(step, (h0, c0), jnp.transpose(outs, (1, 0, 2)))
        outs = jnp.transpose(seq, (1, 0, 2))
    wfc, bfc = params["fc"]
    return outs[:, -1, :] @ wfc.T + bfc


if __name__ == "__main__":
    key = jax.random.PRNGKey(0)
    kp, kx = jax.random.split(key)
    params = init_params(kp, INPUT_D, HIDDEN_D, LAYER_D, OUTPUT_D)
    x = jax.random.normal(kx, (BATCH, SEQ, INPUT_D), dtype=jnp.float32)

    # Weight prep happens once, outside the per-call forward path.
    slab = jax.block_until_ready(prepare_packed_weights(params))

    fwd = jax.jit(lstm_packed_forward)
    out = jax.block_until_ready(fwd(x, slab))
    ref = jax.block_until_ready(reference_forward(x, params))

    assert out.shape == (BATCH, OUTPUT_D), out.shape
    assert jnp.allclose(out, ref, atol=1e-4, rtol=1e-4), (out, ref)

    print("KERNEL_OK")
</pallas_src>

<mosaic_0001>
module attributes {stable_mosaic.version = 11 : i64} {
  func.func @kernel(%arg0: memref<64x16xf32, #tpu.memory_space<vmem>>, %arg1: memref<136x256xf32, #tpu.memory_space<vmem>>, %arg2: memref<8x128xf32, #tpu.memory_space<vmem>>, %arg3: memref<64x256xf32, #tpu.memory_space<vmem>>) attributes {dimension_semantics = [], scalar_prefetch = 0 : i64, scratch_operands = 1 : i64, tpu.core_type = #tpu.core_type<tc>} {
    %c0 = arith.constant 0 : index
    %c0_0 = arith.constant 0 : index
    %0 = vector.load %arg1[%c0, %c0_0] : memref<136x256xf32, #tpu.memory_space<vmem>>, vector<16x256xf32>
    %c16 = arith.constant 16 : index
    %c0_1 = arith.constant 0 : index
    %1 = vector.load %arg1[%c16, %c0_1] : memref<136x256xf32, #tpu.memory_space<vmem>>, vector<64x256xf32>
    %c80 = arith.constant 80 : index
    %c0_2 = arith.constant 0 : index
    %2 = vector.load %arg1[%c80, %c0_2] : memref<136x256xf32, #tpu.memory_space<vmem>>, vector<8x256xf32>
    %c88 = arith.constant 88 : index
    %c0_3 = arith.constant 0 : index
    %3 = vector.load %arg1[%c88, %c0_3] : memref<136x256xf32, #tpu.memory_space<vmem>>, vector<8x256xf32>
    %c0_4 = arith.constant 0 : index
    %c0_5 = arith.constant 0 : index
    %4 = vector.load %arg0[%c0_4, %c0_5] : memref<64x16xf32, #tpu.memory_space<vmem>>, vector<64x16xf32>
    %cst = arith.constant dense<0.000000e+00> : vector<64x256xf32>
    %5 = tpu.matmul %4, %0, %cst {dimension_numbers = #tpu.dot_dimension_numbers<[1], [0], [0], [1], [0, 0, 1, 1], [], []>} : vector<64x16xf32>, vector<16x256xf32>, vector<64x256xf32> -> vector<64x256xf32>
    %c0_6 = arith.constant 0 : index
    %c0_7 = arith.constant 0 : index
    %6 = vector.load %arg3[%c0_6, %c0_7] : memref<64x256xf32, #tpu.memory_space<vmem>>, vector<64x256xf32>
    tpu.vector_store %arg3[%c0_6, %c0_7], %5 {strides = array<i32>} : memref<64x256xf32, #tpu.memory_space<vmem>>, vector<64x256xf32>,
    %7 = arith.addf %2, %3 : vector<8x256xf32>
    %cst_8 = arith.constant 0.000000e+00 : f32
    %8 = vector.broadcast %cst_8 : f32 to vector<8x64xf32>
    %cst_9 = arith.constant 0.000000e+00 : f32
    %9 = vector.broadcast %cst_9 : f32 to vector<8x64xf32>
    %cst_10 = arith.constant dense<0.000000e+00> : vector<8x256xf32>
    %10 = tpu.matmul %8, %1, %cst_10 {dimension_numbers = #tpu.dot_dimension_numbers<[1], [0], [0], [1], [0, 0, 1, 1], [], []>} : vector<8x64xf32>, vector<64x256xf32>, vector<8x256xf32> -> vector<8x256xf32>
    %c0_11 = arith.constant 0 : index
    %c0_12 = arith.constant 0 : index
    %11 = vector.load %arg3[%c0_11, %c0_12] : memref<64x256xf32, #tpu.memory_space<vmem>>, vector<8x256xf32>
    %12 = arith.addf %11, %2 : vector<8x256xf32>
    %13 = arith.addf %10, %12 : vector<8x256xf32>
    %14 = arith.negf %13 : vector<8x256xf32>
    %15 = math.exp %14 : vector<8x256xf32>
    %cst_13 = arith.constant 1.000000e+00 : f32
    %16 = vector.broadcast %cst_13 : f32 to vector<8x256xf32>
    %17 = arith.addf %16, %15 : vector<8x256xf32>
    %18 = arith.divf %16, %17 : vector<8x256xf32>
    %19 = vector.extract_strided_slice %18 {offsets = [0, 0], sizes = [8, 64], strides = [1, 1]} : vector<8x256xf32> to vector<8x64xf32>
    %20 = vector.extract_strided_slice %18 {offsets = [0, 64], sizes = [8, 64], strides = [1, 1]} : vector<8x256xf32> to vector<8x64xf32>
    %21 = vector.extract_strided_slice %18 {offsets = [0, 128], sizes = [8, 64], strides = [1, 1]} : vector<8x256xf32> to vector<8x64xf32>
    %cst_14 = arith.constant 2.000000e+00 : f32
    %22 = vector.broadcast %cst_14 : f32 to vector<8x64xf32>
    %23 = arith.mulf %22, %21 : vector<8x64xf32>
    %cst_15 = arith.constant 1.000000e+00 : f32
    %24 = vector.broadcast %cst_15 : f32 to vector<8x64xf32>
    %25 = arith.subf %23, %24 : vector<8x64xf32>
    %26 = vector.extract_strided_slice %18 {offsets = [0, 192], sizes = [8, 64], strides = [1, 1]} : vector<8x256xf32> to vector<8x64xf32>
    %27 = arith.mulf %20, %9 : vector<8x64xf32>
    %28 = arith.mulf %19, %25 : vector<8x64xf32>
    %29 = arith.addf %27, %28 : vector<8x64xf32>
    %30 = math.tanh %29 : vector<8x64xf32>
    %31 = arith.mulf %26, %30 : vector<8x64xf32>
    %cst_16 = arith.constant dense<0.000000e+00> : vector<8x256xf32>
    %32 = tpu.matmul %31, %1, %cst_16 {dimension_numbers = #tpu.dot_dimension_numbers<[1], [0], [0], [1], [0, 0, 1, 1], [], []>} : vector<8x64xf32>, vector<64x256xf32>, vector<8x256xf32> -> vector<8x256xf32>
    %c8 = arith.constant 8 : index
    %c0_17 = arith.constant 0 : index
    %33 = vector.load %arg3[%c8, %c0_17] : memref<64x256xf32, #tpu.memory_space<vmem>>, vector<8x256xf32>
    %34 = arith.addf %33, %7 : vector<8x256xf32>
    %35 = arith.addf %32, %34 : vector<8x256xf32>
    %36 = arith.negf %35 : vector<8x256xf32>
    %37 = math.exp %36 : vector<8x256xf32>
    %cst_18 = arith.constant 1.000000e+00 : f32
    %38 = vector.broadcast %cst_18 : f32 to vector<8x256xf32>
    %39 = arith.addf %38, %37 : vector<8x256xf32>
    %40 = arith.divf %38, %39 : vector<8x256xf32>
    %41 = vector.extract_strided_slice %40 {offsets = [0, 0], sizes = [8, 64], strides = [1, 1]} : vector<8x256xf32> to vector<8x64xf32>
    %42 = vector.extract_strided_slice %40 {offsets = [0, 64], sizes = [8, 64], strides = [1, 1]} : vector<8x256xf32> to vector<8x64xf32>
    %43 = vector.extract_strided_slice %40 {offsets = [0, 128], sizes = [8, 64], strides = [1, 1]} : vector<8x256xf32> to vector<8x64xf32>
    %cst_19 = arith.constant 2.000000e+00 : f32
    %44 = vector.broadcast %cst_19 : f32 to vector<8x64xf32>
    %45 = arith.mulf %44, %43 : vector<8x64xf32>
    %cst_20 = arith.constant 1.000000e+00 : f32
    %46 = vector.broadcast %cst_20 : f32 to vector<8x64xf32>
    %47 = arith.subf %45, %46 : vector<8x64xf32>
    %48 = vector.extract_strided_slice %40 {offsets = [0, 192], sizes = [8, 64], strides = [1, 1]} : vector<8x256xf32> to vector<8x64xf32>
    %49 = arith.mulf %42, %29 : vector<8x64xf32>
    %50 = arith.mulf %41, %47 : vector<8x64xf32>
    %51 = arith.addf %49, %50 : vector<8x64xf32>
    %52 = math.tanh %51 : vector<8x64xf32>
    %53 = arith.mulf %48, %52 : vector<8x64xf32>
    %cst_21 = arith.constant dense<0.000000e+00> : vector<8x256xf32>
    %54 = tpu.matmul %53, %1, %cst_21 {dimension_numbers = #tpu.dot_dimension_numbers<[1], [0], [0], [1], [0, 0, 1, 1], [], []>} : vector<8x64xf32>, vector<64x256xf32>, vector<8x256xf32> -> vector<8x256xf32>
    %c16_22 = arith.constant 16 : index
    %c0_23 = arith.constant 0 : index
    %55 = vector.load %arg3[%c16_22, %c0_23] : memref<64x256xf32, #tpu.memory_space<vmem>>, vector<8x256xf32>
    %56 = arith.addf %55, %7 : vector<8x256xf32>
    %57 = arith.addf %54, %56 : vector<8x256xf32>
    %58 = arith.negf %57 : vector<8x256xf32>
    %59 = math.exp %58 : vector<8x256xf32>
    %cst_24 = arith.constant 1.000000e+00 : f32
    %60 = vector.broadcast %cst_24 : f32 to vector<8x256xf32>
    %61 = arith.addf %60, %59 : vector<8x256xf32>
    %62 = arith.divf %60, %61 : vector<8x256xf32>
    %63 = vector.extract_strided_slice %62 {offsets = [0, 0], sizes = [8, 64], strides = [1, 1]} : vector<8x256xf32> to vector<8x64xf32>
    %64 = vector.extract_strided_slice %62 {offsets = [0, 64], sizes = [8, 64], strides = [1, 1]} : vector<8x256xf32> to vector<8x64xf32>
    %65 = vector.extract_strided_slice %62 {offsets = [0, 128], sizes = [8, 64], strides = [1, 1]} : vector<8x256xf32> to vector<8x64xf32>
    %cst_25 = arith.constant 2.000000e+00 : f32
    %66 = vector.broadcast %cst_25 : f32 to vector<8x64xf32>
    %67 = arith.mulf %66, %65 : vector<8x64xf32>
    %cst_26 = arith.constant 1.000000e+00 : f32
    %68 = vector.broadcast %cst_26 : f32 to vector<8x64xf32>
    %69 = arith.subf %67, %68 : vector<8x64xf32>
    %70 = vector.extract_strided_slice %62 {offsets = [0, 192], sizes = [8, 64], strides = [1, 1]} : vector<8x256xf32> to vector<8x64xf32>
    %71 = arith.mulf %64, %51 : vector<8x64xf32>
    %72 = arith.mulf %63, %69 : vector<8x64xf32>
    %73 = arith.addf %71, %72 : vector<8x64xf32>
    %74 = math.tanh %73 : vector<8x64xf32>
    %75 = arith.mulf %70, %74 : vector<8x64xf32>
    %cst_27 = arith.constant dense<0.000000e+00> : vector<8x256xf32>
    %76 = tpu.matmul %75, %1, %cst_27 {dimension_numbers = #tpu.dot_dimension_numbers<[1], [0], [0], [1], [0, 0, 1, 1], [], []>} : vector<8x64xf32>, vector<64x256xf32>, vector<8x256xf32> -> vector<8x256xf32>
    %c24 = arith.constant 24 : index
    %c0_28 = arith.constant 0 : index
    %77 = vector.load %arg3[%c24, %c0_28] : memref<64x256xf32, #tpu.memory_space<vmem>>, vector<8x256xf32>
    %78 = arith.addf %77, %7 : vector<8x256xf32>
    %79 = arith.addf %76, %78 : vector<8x256xf32>
    %80 = arith.negf %79 : vector<8x256xf32>
    %81 = math.exp %80 : vector<8x256xf32>
    %cst_29 = arith.constant 1.000000e+00 : f32
    %82 = vector.broadcast %cst_29 : f32 to vector<8x256xf32>
    %83 = arith.addf %82, %81 : vector<8x256xf32>
    %84 = arith.divf %82, %83 : vector<8x256xf32>
    %85 = vector.extract_strided_slice %84 {offsets = [0, 0], sizes = [8, 64], strides = [1, 1]} : vector<8x256xf32> to vector<8x64xf32>
    %86 = vector.extract_strided_slice %84 {offsets = [0, 64], sizes = [8, 64], strides = [1, 1]} : vector<8x256xf32> to vector<8x64xf32>
    %87 = vector.extract_strided_slice %84 {offsets = [0, 128], sizes = [8, 64], strides = [1, 1]} : vector<8x256xf32> to vector<8x64xf32>
    %cst_30 = arith.constant 2.000000e+00 : f32
    %88 = vector.broadcast %cst_30 : f32 to vector<8x64xf32>
    %89 = arith.mulf %88, %87 : vector<8x64xf32>
    %cst_31 = arith.constant 1.000000e+00 : f32
    %90 = vector.broadcast %cst_31 : f32 to vector<8x64xf32>
    %91 = arith.subf %89, %90 : vector<8x64xf32>
    %92 = vector.extract_strided_slice %84 {offsets = [0, 192], sizes = [8, 64], strides = [1, 1]} : vector<8x256xf32> to vector<8x64xf32>
    %93 = arith.mulf %86, %73 : vector<8x64xf32>
    %94 = arith.mulf %85, %91 : vector<8x64xf32>
    %95 = arith.addf %93, %94 : vector<8x64xf32>
    %96 = math.tanh %95 : vector<8x64xf32>
    %97 = arith.mulf %92, %96 : vector<8x64xf32>
    %cst_32 = arith.constant dense<0.000000e+00> : vector<8x256xf32>
    %98 = tpu.matmul %97, %1, %cst_32 {dimension_numbers = #tpu.dot_dimension_numbers<[1], [0], [0], [1], [0, 0, 1, 1], [], []>} : vector<8x64xf32>, vector<64x256xf32>, vector<8x256xf32> -> vector<8x256xf32>
    %c32 = arith.constant 32 : index
    %c0_33 = arith.constant 0 : index
    %99 = vector.load %arg3[%c32, %c0_33] : memref<64x256xf32, #tpu.memory_space<vmem>>, vector<8x256xf32>
    %100 = arith.addf %99, %7 : vector<8x256xf32>
    %101 = arith.addf %98, %100 : vector<8x256xf32>
    %102 = arith.negf %101 : vector<8x256xf32>
    %103 = math.exp %102 : vector<8x256xf32>
    %cst_34 = arith.constant 1.000000e+00 : f32
    %104 = vector.broadcast %cst_34 : f32 to vector<8x256xf32>
    %105 = arith.addf %104, %103 : vector<8x256xf32>
    %106 = arith.divf %104, %105 : vector<8x256xf32>
    %107 = vector.extract_strided_slice %106 {offsets = [0, 0], sizes = [8, 64], strides = [1, 1]} : vector<8x256xf32> to vector<8x64xf32>
    %108 = vector.extract_strided_slice %106 {offsets = [0, 64], sizes = [8, 64], strides = [1, 1]} : vector<8x256xf32> to vector<8x64xf32>
    %109 = vector.extract_strided_slice %106 {offsets = [0, 128], sizes = [8, 64], strides = [1, 1]} : vector<8x256xf32> to vector<8x64xf32>
    %cst_35 = arith.constant 2.000000e+00 : f32
    %110 = vector.broadcast %cst_35 : f32 to vector<8x64xf32>
    %111 = arith.mulf %110, %109 : vector<8x64xf32>
    %cst_36 = arith.constant 1.000000e+00 : f32
    %112 = vector.broadcast %cst_36 : f32 to vector<8x64xf32>
    %113 = arith.subf %111, %112 : vector<8x64xf32>
    %114 = vector.extract_strided_slice %106 {offsets = [0, 192], sizes = [8, 64], strides = [1, 1]} : vector<8x256xf32> to vector<8x64xf32>
    %115 = arith.mulf %108, %95 : vector<8x64xf32>
    %116 = arith.mulf %107, %113 : vector<8x64xf32>
    %117 = arith.addf %115, %116 : vector<8x64xf32>
    %118 = math.tanh %117 : vector<8x64xf32>
    %119 = arith.mulf %114, %118 : vector<8x64xf32>
    %cst_37 = arith.constant dense<0.000000e+00> : vector<8x256xf32>
    %120 = tpu.matmul %119, %1, %cst_37 {dimension_numbers = #tpu.dot_dimension_numbers<[1], [0], [0], [1], [0, 0, 1, 1], [], []>} : vector<8x64xf32>, vector<64x256xf32>, vector<8x256xf32> -> vector<8x256xf32>
    %c40 = arith.constant 40 : index
    %c0_38 = arith.constant 0 : index
    %121 = vector.load %arg3[%c40, %c0_38] : memref<64x256xf32, #tpu.memory_space<vmem>>, vector<8x256xf32>
    %122 = arith.addf %121, %7 : vector<8x256xf32>
    %123 = arith.addf %120, %122 : vector<8x256xf32>
    %124 = arith.negf %123 : vector<8x256xf32>
    %125 = math.exp %124 : vector<8x256xf32>
    %cst_39 = arith.constant 1.000000e+00 : f32
    %126 = vector.broadcast %cst_39 : f32 to vector<8x256xf32>
    %127 = arith.addf %126, %125 : vector<8x256xf32>
    %128 = arith.divf %126, %127 : vector<8x256xf32>
    %129 = vector.extract_strided_slice %128 {offsets = [0, 0], sizes = [8, 64], strides = [1, 1]} : vector<8x256xf32> to vector<8x64xf32>
    %130 = vector.extract_strided_slice %128 {offsets = [0, 64], sizes = [8, 64], strides = [1, 1]} : vector<8x256xf32> to vector<8x64xf32>
    %131 = vector.extract_strided_slice %128 {offsets = [0, 128], sizes = [8, 64], strides = [1, 1]} : vector<8x256xf32> to vector<8x64xf32>
    %cst_40 = arith.constant 2.000000e+00 : f32
    %132 = vector.broadcast %cst_40 : f32 to vector<8x64xf32>
    %133 = arith.mulf %132, %131 : vector<8x64xf32>
    %cst_41 = arith.constant 1.000000e+00 : f32
    %134 = vector.broadcast %cst_41 : f32 to vector<8x64xf32>
    %135 = arith.subf %133, %134 : vector<8x64xf32>
    %136 = vector.extract_strided_slice %128 {offsets = [0, 192], sizes = [8, 64], strides = [1, 1]} : vector<8x256xf32> to vector<8x64xf32>
    %137 = arith.mulf %130, %117 : vector<8x64xf32>
    %138 = arith.mulf %129, %135 : vector<8x64xf32>
    %139 = arith.addf %137, %138 : vector<8x64xf32>
    %140 = math.tanh %139 : vector<8x64xf32>
    %141 = arith.mulf %136, %140 : vector<8x64xf32>
    %cst_42 = arith.constant dense<0.000000e+00> : vector<8x256xf32>
    %142 = tpu.matmul %141, %1, %cst_42 {dimension_numbers = #tpu.dot_dimension_numbers<[1], [0], [0], [1], [0, 0, 1, 1], [], []>} : vector<8x64xf32>, vector<64x256xf32>, vector<8x256xf32> -> vector<8x256xf32>
    %c48 = arith.constant 48 : index
    %c0_43 = arith.constant 0 : index
    %143 = vector.load %arg3[%c48, %c0_43] : memref<64x256xf32, #tpu.memory_space<vmem>>, vector<8x256xf32>
    %144 = arith.addf %143, %7 : vector<8x256xf32>
    %145 = arith.addf %142, %144 : vector<8x256xf32>
    %146 = arith.negf %145 : vector<8x256xf32>
    %147 = math.exp %146 : vector<8x256xf32>
    %cst_44 = arith.constant 1.000000e+00 : f32
    %148 = vector.broadcast %cst_44 : f32 to vector<8x256xf32>
    %149 = arith.addf %148, %147 : vector<8x256xf32>
    %150 = arith.divf %148, %149 : vector<8x256xf32>
    %151 = vector.extract_strided_slice %150 {offsets = [0, 0], sizes = [8, 64], strides = [1, 1]} : vector<8x256xf32> to vector<8x64xf32>
    %152 = vector.extract_strided_slice %150 {offsets = [0, 64], sizes = [8, 64], strides = [1, 1]} : vector<8x256xf32> to vector<8x64xf32>
    %153 = vector.extract_strided_slice %150 {offsets = [0, 128], sizes = [8, 64], strides = [1, 1]} : vector<8x256xf32> to vector<8x64xf32>
    %cst_45 = arith.constant 2.000000e+00 : f32
    %154 = vector.broadcast %cst_45 : f32 to vector<8x64xf32>
    %155 = arith.mulf %154, %153 : vector<8x64xf32>
    %cst_46 = arith.constant 1.000000e+00 : f32
    %156 = vector.broadcast %cst_46 : f32 to vector<8x64xf32>
    %157 = arith.subf %155, %156 : vector<8x64xf32>
    %158 = vector.extract_strided_slice %150 {offsets = [0, 192], sizes = [8, 64], strides = [1, 1]} : vector<8x256xf32> to vector<8x64xf32>
    %159 = arith.mulf %152, %139 : vector<8x64xf32>
    %160 = arith.mulf %151, %157 : vector<8x64xf32>
    %161 = arith.addf %159, %160 : vector<8x64xf32>
    %162 = math.tanh %161 : vector<8x64xf32>
    %163 = arith.mulf %158, %162 : vector<8x64xf32>
    %cst_47 = arith.constant dense<0.000000e+00> : vector<8x256xf32>
    %164 = tpu.matmul %163, %1, %cst_47 {dimension_numbers = #tpu.dot_dimension_numbers<[1], [0], [0], [1], [0, 0, 1, 1], [], []>} : vector<8x64xf32>, vector<64x256xf32>, vector<8x256xf32> -> vector<8x256xf32>
    %c56 = arith.constant 56 : index
    %c0_48 = arith.constant 0 : index
    %165 = vector.load %arg3[%c56, %c0_48] : memref<64x256xf32, #tpu.memory_space<vmem>>, vector<8x256xf32>
    %166 = arith.addf %165, %7 : vector<8x256xf32>
    %167 = arith.addf %164, %166 : vector<8x256xf32>
    %168 = arith.negf %167 : vector<8x256xf32>
    %169 = math.exp %168 : vector<8x256xf32>
    %cst_49 = arith.constant 1.000000e+00 : f32
    %170 = vector.broadcast %cst_49 : f32 to vector<8x256xf32>
    %171 = arith.addf %170, %169 : vector<8x256xf32>
    %172 = arith.divf %170, %171 : vector<8x256xf32>
    %173 = vector.extract_strided_slice %172 {offsets = [0, 0], sizes = [8, 64], strides = [1, 1]} : vector<8x256xf32> to vector<8x64xf32>
    %174 = vector.extract_strided_slice %172 {offsets = [0, 64], sizes = [8, 64], strides = [1, 1]} : vector<8x256xf32> to vector<8x64xf32>
    %175 = vector.extract_strided_slice %172 {offsets = [0, 128], sizes = [8, 64], strides = [1, 1]} : vector<8x256xf32> to vector<8x64xf32>
    %cst_50 = arith.constant 2.000000e+00 : f32
    %176 = vector.broadcast %cst_50 : f32 to vector<8x64xf32>
    %177 = arith.mulf %176, %175 : vector<8x64xf32>
    %cst_51 = arith.constant 1.000000e+00 : f32
    %178 = vector.broadcast %cst_51 : f32 to vector<8x64xf32>
    %179 = arith.subf %177, %178 : vector<8x64xf32>
    %180 = vector.extract_strided_slice %172 {offsets = [0, 192], sizes = [8, 64], strides = [1, 1]} : vector<8x256xf32> to vector<8x64xf32>
    %181 = arith.mulf %174, %161 : vector<8x64xf32>
    %182 = arith.mulf %173, %179 : vector<8x64xf32>
    %183 = arith.addf %181, %182 : vector<8x64xf32>
    %184 = math.tanh %183 : vector<8x64xf32>
    %185 = arith.mulf %180, %184 : vector<8x64xf32>
    %cst_52 = arith.constant dense<0.000000e+00> : vector<8x256xf32>
    %186 = tpu.matmul %185, %1, %cst_52 {dimension_numbers = #tpu.dot_dimension_numbers<[1], [0], [0], [1], [0, 0, 1, 1], [], []>} : vector<8x64xf32>, vector<64x256xf32>, vector<8x256xf32> -> vector<8x256xf32>
    %187 = arith.addf %186, %3 : vector<8x256xf32>
    %188 = arith.negf %187 : vector<8x256xf32>
    %189 = math.exp %188 : vector<8x256xf32>
    %cst_53 = arith.constant 1.000000e+00 : f32
    %190 = vector.broadcast %cst_53 : f32 to vector<8x256xf32>
    %191 = arith.addf %190, %189 : vector<8x256xf32>
    %192 = arith.divf %190, %191 : vector<8x256xf32>
    %193 = vector.extract_strided_slice %192 {offsets = [0, 0], sizes = [8, 64], strides = [1, 1]} : vector<8x256xf32> to vector<8x64xf32>
    %194 = vector.extract_strided_slice %192 {offsets = [0, 64], sizes = [8, 64], strides = [1, 1]} : vector<8x256xf32> to vector<8x64xf32>
    %195 = vector.extract_strided_slice %192 {offsets = [0, 128], sizes = [8, 64], strides = [1, 1]} : vector<8x256xf32> to vector<8x64xf32>
    %cst_54 = arith.constant 2.000000e+00 : f32
    %196 = vector.broadcast %cst_54 : f32 to vector<8x64xf32>
    %197 = arith.mulf %196, %195 : vector<8x64xf32>
    %cst_55 = arith.constant 1.000000e+00 : f32
    %198 = vector.broadcast %cst_55 : f32 to vector<8x64xf32>
    %199 = arith.subf %197, %198 : vector<8x64xf32>
    %200 = vector.extract_strided_slice %192 {offsets = [0, 192], sizes = [8, 64], strides = [1, 1]} : vector<8x256xf32> to vector<8x64xf32>
    %201 = arith.mulf %194, %183 : vector<8x64xf32>
    %202 = arith.mulf %193, %199 : vector<8x64xf32>
    %203 = arith.addf %201, %202 : vector<8x64xf32>
    %204 = math.tanh %203 : vector<8x64xf32>
    %205 = arith.mulf %200, %204 : vector<8x64xf32>
    %c96 = arith.constant 96 : index
    %c0_56 = arith.constant 0 : index
    %206 = vector.load %arg1[%c96, %c0_56] : memref<136x256xf32, #tpu.memory_space<vmem>>, vector<32x128xf32>
    %c128 = arith.constant 128 : index
    %c0_57 = arith.constant 0 : index
    %207 = vector.load %arg1[%c128, %c0_57] : memref<136x256xf32, #tpu.memory_space<vmem>>, vector<8x128xf32>
    %208 = vector.extract_strided_slice %205 {offsets = [0, 32], sizes = [8, 32], strides = [1, 1]} : vector<8x64xf32> to vector<8x32xf32>
    %cst_58 = arith.constant dense<0.000000e+00> : vector<8x128xf32>
    %209 = tpu.matmul %208, %206, %cst_58 {dimension_numbers = #tpu.dot_dimension_numbers<[1], [0], [0], [1], [0, 0, 1, 1], [], []>} : vector<8x32xf32>, vector<32x128xf32>, vector<8x128xf32> -> vector<8x128xf32>
    %210 = arith.addf %209, %207 : vector<8x128xf32>
    %c0_59 = arith.constant 0 : index
    %c0_60 = arith.constant 0 : index
    %211 = vector.load %arg2[%c0_59, %c0_60] : memref<8x128xf32, #tpu.memory_space<vmem>>, vector<8x128xf32>
    tpu.vector_store %arg2[%c0_59, %c0_60], %210 {strides = array<i32>} : memref<8x128xf32, #tpu.memory_space<vmem>>, vector<8x128xf32>,
    return
  }
}

</mosaic_0001>

<llo_original>
// kernel: lstm_packed_forward.1
$region0: #{lstm_packed_forward.1}
  #allocation0 [shape = 'u32[]', space=smem, size = 0x4, offset = 0x4, fixed_abs, tag = 'smem constant byte address 0x4 - core index']
  #allocation1 [shape = 'u32[144,128]{1,0:T(1,128)}', space=vmem, size = 0x12000, scoped, tag = 'internal scratch']
  #allocation2 [shape = 'f32[64,256]{1,0:T(8,128)}', space=vmem, size = 0x10000, scoped, tag = 'scratch operand']
  %s0 = inlined_call_operand.vmem [shape: f32[64,16], index: 0, kind: input, shape index: {}]
  %s1 = inlined_call_operand.hbm [shape: f32[136,256], index: 1, kind: input, shape index: {}]
  %s2 = inlined_call_operand.vmem [shape: f32[8,128], index: 2, kind: output, shape index: {}]
  %s3 = sld [smem:[#allocation0]]
  $region22: #{lstm_packed_forward.1} parent=0
    _
  %s5 = ssub.s32 1, %s3
  %s6 = scalar_select 0, %s5, %s3
  $region1: #{lstm_packed_forward.1} parent=0
    #allocation3 [shape = 'u8[139264]{0}', space=vmem, size = 0x22000, scoped, tag = 'input window, operand 1, single buffered']
    #allocation4 [shape = 's32[1]{0}', space=sflag, size = 0x4, scoped, tag = 'scoped memory for lstm_packed_forward.1']
    %7 = vsyncpa [#allocation4], 0
    // Predicated region
    $region2: #{lstm_packed_forward.1} parent=1 // pred_check
      _
    $region3: #{lstm_packed_forward.1} parent=1 // pred_check_branch
      %9 = sbr.rel (0) target = $region5
    $region4: #{lstm_packed_forward.1} parent=1 // pred_region
      _
    $region5: #{lstm_packed_forward.1} parent=1 // pred_fallthru
      _
    // Predicated region
    $region6: #{lstm_packed_forward.1} parent=1 // pred_check
      _
    $region7: #{lstm_packed_forward.1} parent=1 // pred_check_branch
      %11 = sbr.rel (0) target = $region9
    $region8: #{lstm_packed_forward.1} parent=1 // pred_region
      %s13 = ssub.s32 4352, 4352
      %14 = vsyncadd [#allocation4], %s13
      %s15 = sshll.u32 [#allocation3], 4
      %s16 = int_to_ptr.vmem [resolvable:$true] %s15
      %21 = dma.hbm_to_vmem [thread:$0]  %s1, 4352, %s16, [#allocation4], 256, 256, 16
    $region9: #{lstm_packed_forward.1} parent=1 // pred_fallthru
      _
    // Predicated region
    $region10: #{lstm_packed_forward.1} parent=1 // pred_check
      _
    $region11: #{lstm_packed_forward.1} parent=1 // pred_check_branch
      %23 = sbr.rel (0) target = $region13
    $region12: #{lstm_packed_forward.1} parent=1 // pred_region
      %24 = dma.done [#allocation4], 4352
    $region13: #{lstm_packed_forward.1} parent=1 // pred_fallthru
      _
    %v25 = vld [vmem:[#allocation3] sm:$0xff]
    %v26 = vld [vmem:[#allocation3 + $0x8] sm:$0xff]
    %v27 = vld [vmem:[#allocation3 + $0x10] sm:$0xff]
    %v28 = vld [vmem:[#allocation3 + $0x18] sm:$0xff]
    %v29 = vld [vmem:[#allocation3 + $0x20] sm:$0xff]
    %v30 = vld [vmem:[#allocation3 + $0x28] sm:$0xff]
    %v31 = vld [vmem:[#allocation3 + $0x30] sm:$0xff]
    %v32 = vld [vmem:[#allocation3 + $0x38] sm:$0xff]
    %v33 = vld [vmem:[#allocation3 + $0x40] sm:$0xff]
    %v34 = vld [vmem:[#allocation3 + $0x48] sm:$0xff]
    %v35 = vld [vmem:[#allocation3 + $0x50] sm:$0xff]
    %v36 = vld [vmem:[#allocation3 + $0x58] sm:$0xff]
    %v37 = vld [vmem:[#allocation3 + $0x60] sm:$0xff]
    %v38 = vld [vmem:[#allocation3 + $0x68] sm:$0xff]
    %v39 = vld [vmem:[#allocation3 + $0x70] sm:$0xff]
    %v40 = vld [vmem:[#allocation3 + $0x78] sm:$0xff]
    %v41 = vld [vmem:[#allocation3 + $0x80] sm:$0xff]
    %v42 = vld [vmem:[#allocation3 + $0x88] sm:$0xff]
    %v43 = vld [vmem:[#allocation3 + $0x90] sm:$0xff]
    %v44 = vld [vmem:[#allocation3 + $0x98] sm:$0xff]
    %v45 = vld [vmem:[#allocation3 + $0xa0] sm:$0xff]
    %v46 = vld [vmem:[#allocation3 + $0xa8] sm:$0xff]
    %v47 = vld [vmem:[#allocation3 + $0xb0] sm:$0xff]
    %v48 = vld [vmem:[#allocation3 + $0xb8] sm:$0xff]
    %v49 = vld [vmem:[%s0] sm:$0xff]
    %v50 = vld [vmem:[%s0 + $0x8] sm:$0xff]
    %v51 = vld [vmem:[%s0 + $0x10] sm:$0xff]
    %v52 = vld [vmem:[%s0 + $0x18] sm:$0xff]
    %v53 = vld [vmem:[%s0 + $0x20] sm:$0xff]
    %v54 = vld [vmem:[%s0 + $0x28] sm:$0xff]
    %v55 = vld [vmem:[%s0 + $0x30] sm:$0xff]
    %v56 = vld [vmem:[%s0 + $0x38] sm:$0xff]
    %vm57 = vcmask 130048
    %v59 = vsel %vm57, %v49, 0
    %v62 = vsel %vm57, %v50, 0
    %v65 = vsel %vm57, %v51, 0
    %v68 = vsel %vm57, %v52, 0
    %v71 = vsel %vm57, %v53, 0
    %v74 = vsel %vm57, %v54, 0
    %v77 = vsel %vm57, %v55, 0
    %v80 = vsel %vm57, %v56, 0
    %82 = vmatprep.subr.mxu0 %v26
    %83 = vmatpush1.msra.mxu0 %v25
    %84 = vmatprep.subr.mxu0 %v28
    %85 = vmatpush1.msra.mxu0 %v27
    %86 = vmatprep.subr.mxu0 0.0
    %87 = vmatpush1.msra.mxu0 0.0
    %88 = vmatprep.subr.mxu0 0.0
    %89 = vmatpush1.msra.mxu0 0.0
    %90 = vmatprep.subr.mxu0 0.0
    %91 = vmatpush1.msra.mxu0 0.0
    %92 = vmatprep.subr.mxu0 0.0
    %93 = vmatpush1.msra.mxu0 0.0
    %94 = vmatprep.subr.mxu0 0.0
    %95 = vmatpush1.msra.mxu0 0.0
    %96 = vmatprep.subr.mxu0 0.0
    %97 = vmatpush1.msra.mxu0 0.0
    %98 = vmatprep.subr.mxu0 0.0
    %99 = vmatpush1.msra.mxu0 0.0
    %100 = vmatprep.subr.mxu0 0.0
    %101 = vmatpush1.msra.mxu0 0.0
    %102 = vmatprep.subr.mxu0 0.0
    %103 = vmatpush1.msra.mxu0 0.0
    %104 = vmatprep.subr.mxu0 0.0
    %105 = vmatpush1.msra.mxu0 0.0
    %106 = vmatprep.subr.mxu0 0.0
    %107 = vmatpush1.msra.mxu0 0.0
    %108 = vmatprep.subr.mxu0 0.0
    %109 = vmatpush1.msra.mxu0 0.0
    %110 = vmatprep.subr.mxu0 0.0
    %111 = vmatpush1.msra.mxu0 0.0
    %112 = vmatprep.subr.mxu0 0.0
    %113 = vmatpush1.msra.mxu0 0.0
    %114 = vmatprep.subr.mxu0 0.0
    %115 = vmatpush1.msra.mxu0 0.0
    %116 = vmatprep.subr.mxu0 0.0
    %117 = vmatpush1.msra.mxu0 0.0
    %118 = vmatprep.subr.mxu0 0.0
    %119 = vmatpush1.msra.mxu0 0.0
    %120 = vmatprep.subr.mxu0 0.0
    %121 = vmatpush1.msra.mxu0 0.0
    %122 = vmatprep.subr.mxu0 0.0
    %123 = vmatpush1.msra.mxu0 0.0
    %124 = vmatprep.subr.mxu0 0.0
    %125 = vmatpush1.msra.mxu0 0.0
    %126 = vmatprep.subr.mxu0 0.0
    %127 = vmatpush1.msra.mxu0 0.0
    %128 = vmatprep.subr.mxu0 0.0
    %129 = vmatpush1.msra.mxu0 0.0
    %130 = vmatprep.subr.mxu0 0.0
    %131 = vmatpush1.msra.mxu0 0.0
    %132 = vmatprep.subr.mxu0 0.0
    %133 = vmatpush1.msra.mxu0 0.0
    %134 = vmatprep.subr.mxu0 0.0
    %135 = vmatpush1.msra.mxu0 0.0
    %136 = vmatprep.subr.mxu0 0.0
    %137 = vmatpush1.msra.mxu0 0.0
    %138 = vmatprep.subr.mxu0 0.0
    %139 = vmatpush1.msra.mxu0 0.0
    %140 = vmatprep.subr.mxu0 0.0
    %141 = vmatpush1.msra.mxu0 0.0
    %142 = vmatprep.subr.mxu0 0.0
    %143 = vmatpush1.msra.mxu0 0.0
    %144 = vmatprep.subr.mxu0 0.0
    %145 = vmatpush1.msra.mxu0 0.0
    %146 = vmatprep.mubr.f32.mxu0 0.0
    %147 = vmatmul.mubr.f32.gmra.mrb[0].mxu0 %v59
    %v148 = vpop.f32.mrb[0].mxu0
    %v149 = vadd.f32 0.0, %v148
    %v150 = vpop.f32.mrb[0].mxu0
    %v151 = vadd.f32 0.0, %v150
    %152 = vmatprep.mubr.f32.mxu0 0.0
    %153 = vmatmul.mubr.f32.gmra.mrb[0].mxu0 %v62
    %v154 = vpop.f32.mrb[0].mxu0
    %v155 = vadd.f32 0.0, %v154
    %v156 = vpop.f32.mrb[0].mxu0
    %v157 = vadd.f32 0.0, %v156
    %158 = vmatprep.mubr.f32.mxu0 0.0
    %159 = vmatmul.mubr.f32.gmra.mrb[0].mxu0 %v65
    %v160 = vpop.f32.mrb[0].mxu0
    %v161 = vadd.f32 0.0, %v160
    %v162 = vpop.f32.mrb[0].mxu0
    %v163 = vadd.f32 0.0, %v162
    %164 = vmatprep.mubr.f32.mxu0 0.0
    %165 = vmatmul.mubr.f32.gmra.mrb[0].mxu0 %v68
    %v166 = vpop.f32.mrb[0].mxu0
    %v167 = vadd.f32 0.0, %v166
    %v168 = vpop.f32.mrb[0].mxu0
    %v169 = vadd.f32 0.0, %v168
    %170 = vmatprep.mubr.f32.mxu0 0.0
    %171 = vmatmul.mubr.f32.gmra.mrb[0].mxu0 %v71
    %v172 = vpop.f32.mrb[0].mxu0
    %v173 = vadd.f32 0.0, %v172
    %v174 = vpop.f32.mrb[0].mxu0
    %v175 = vadd.f32 0.0, %v174
    %176 = vmatprep.mubr.f32.mxu0 0.0
    %177 = vmatmul.mubr.f32.gmra.mrb[0].mxu0 %v74
    %v178 = vpop.f32.mrb[0].mxu0
    %v179 = vadd.f32 0.0, %v178
    %v180 = vpop.f32.mrb[0].mxu0
    %v181 = vadd.f32 0.0, %v180
    %182 = vmatprep.mubr.f32.mxu0 0.0
    %183 = vmatmul.mubr.f32.gmra.mrb[0].mxu0 %v77
    %v184 = vpop.f32.mrb[0].mxu0
    %v185 = vadd.f32 0.0, %v184
    %v186 = vpop.f32.mrb[0].mxu0
    %v187 = vadd.f32 0.0, %v186
    %188 = vmatprep.mubr.f32.mxu0 0.0
    %189 = vmatmul.mubr.f32.gmra.mrb[0].mxu0 %v80
    %v190 = vpop.f32.mrb[0].mxu0
    %v191 = vadd.f32 0.0, %v190
    %v192 = vpop.f32.mrb[0].mxu0
    %v193 = vadd.f32 0.0, %v192
    %194 = vdwg.mxu0
    %195 = vst [vmem:[#allocation2] sm:$0xff] %v149
    %196 = vst [vmem:[#allocation2 + $0x8] sm:$0xff] %v151
    %197 = vst [vmem:[#allocation2 + $0x10] sm:$0xff] %v155
    %198 = vst [vmem:[#allocation2 + $0x18] sm:$0xff] %v157
    %199 = vst [vmem:[#allocation2 + $0x20] sm:$0xff] %v161
    %200 = vst [vmem:[#allocation2 + $0x28] sm:$0xff] %v163
    %201 = vst [vmem:[#allocation2 + $0x30] sm:$0xff] %v167
    %202 = vst [vmem:[#allocation2 + $0x38] sm:$0xff] %v169
    %203 = vst [vmem:[#allocation2 + $0x40] sm:$0xff] %v173
    %204 = vst [vmem:[#allocation2 + $0x48] sm:$0xff] %v175
    %205 = vst [vmem:[#allocation2 + $0x50] sm:$0xff] %v179
    %206 = vst [vmem:[#allocation2 + $0x58] sm:$0xff] %v181
    %207 = vst [vmem:[#allocation2 + $0x60] sm:$0xff] %v185
    %208 = vst [vmem:[#allocation2 + $0x68] sm:$0xff] %v187
    %209 = vst [vmem:[#allocation2 + $0x70] sm:$0xff] %v191
    %210 = vst [vmem:[#allocation2 + $0x78] sm:$0xff] %v193
    %v211 = vadd.f32 %v45, %v47
    %v212 = vadd.f32 %v46, %v48
    %v213 = vld [vmem:[#allocation2] sm:$0xff]
    %v214 = vld [vmem:[#allocation2 + $0x8] sm:$0xff]
    %v215 = vadd.f32 %v213, %v45
    %v216 = vadd.f32 %v214, %v46
    %vm217 = vcmask 523264
    %v219 = vsel %vm217, 0.0, 0
    %221 = vmatprep.subr.mxu0 %v30
    %222 = vmatpush1.msra.mxu0 %v29
    %223 = vmatprep.subr.mxu0 %v32
    %224 = vmatpush1.msra.mxu0 %v31
    %225 = vmatprep.subr.mxu0 %v34
    %226 = vmatpush1.msra.mxu0 %v33
    %227 = vmatprep.subr.mxu0 %v36
    %228 = vmatpush1.msra.mxu0 %v35
    %229 = vmatprep.subr.mxu0 %v38
    %230 = vmatpush1.msra.mxu0 %v37
    %231 = vmatprep.subr.mxu0 %v40
    %232 = vmatpush1.msra.mxu0 %v39
    %233 = vmatprep.subr.mxu0 %v42
    %234 = vmatpush1.msra.mxu0 %v41
    %235 = vmatprep.subr.mxu0 %v44
    %236 = vmatpush1.msra.mxu0 %v43
    %237 = vmatprep.subr.mxu0 0.0
    %238 = vmatpush1.msra.mxu0 0.0
    %239 = vmatprep.subr.mxu0 0.0
    %240 = vmatpush1.msra.mxu0 0.0
    %241 = vmatprep.subr.mxu0 0.0
    %242 = vmatpush1.msra.mxu0 0.0
    %243 = vmatprep.subr.mxu0 0.0
    %244 = vmatpush1.msra.mxu0 0.0
    %245 = vmatprep.subr.mxu0 0.0
    %246 = vmatpush1.msra.mxu0 0.0
    %247 = vmatprep.subr.mxu0 0.0
    %248 = vmatpush1.msra.mxu0 0.0
    %249 = vmatprep.subr.mxu0 0.0
    %250 = vmatpush1.msra.mxu0 0.0
    %251 = vmatprep.subr.mxu0 0.0
    %252 = vmatpush1.msra.mxu0 0.0
    %253 = vmatprep.subr.mxu0 0.0
    %254 = vmatpush1.msra.mxu0 0.0
    %255 = vmatprep.subr.mxu0 0.0
    %256 = vmatpush1.msra.mxu0 0.0
    %257 = vmatprep.subr.mxu0 0.0
    %258 = vmatpush1.msra.mxu0 0.0
    %259 = vmatprep.subr.mxu0 0.0
    %260 = vmatpush1.msra.mxu0 0.0
    %261 = vmatprep.subr.mxu0 0.0
    %262 = vmatpush1.msra.mxu0 0.0
    %263 = vmatprep.subr.mxu0 0.0
    %264 = vmatpush1.msra.mxu0 0.0
    %265 = vmatprep.subr.mxu0 0.0
    %266 = vmatpush1.msra.mxu0 0.0
    %267 = vmatprep.subr.mxu0 0.0
    %268 = vmatpush1.msra.mxu0 0.0
    %269 = vmatprep.subr.mxu0 0.0
    %270 = vmatpush1.msra.mxu0 0.0
    %271 = vmatprep.subr.mxu0 0.0
    %272 = vmatpush1.msra.mxu0 0.0
    %273 = vmatprep.subr.mxu0 0.0
    %274 = vmatpush1.msra.mxu0 0.0
    %275 = vmatprep.subr.mxu0 0.0
    %276 = vmatpush1.msra.mxu0 0.0
    %277 = vmatprep.subr.mxu0 0.0
    %278 = vmatpush1.msra.mxu0 0.0
    %279 = vmatprep.subr.mxu0 0.0
    %280 = vmatpush1.msra.mxu0 0.0
    %281 = vmatprep.subr.mxu0 0.0
    %282 = vmatpush1.msra.mxu0 0.0
    %283 = vmatprep.subr.mxu0 0.0
    %284 = vmatpush1.msra.mxu0 0.0
    %285 = vmatprep.mubr.f32.mxu0 0.0
    %286 = vmatmul.mubr.f32.gmra.mrb[0].mxu0 %v219
    %v287 = vpop.f32.mrb[0].mxu0
    %v288 = vadd.f32 %v215, %v287
    %v289 = vpop.f32.mrb[0].mxu0
    %v290 = vadd.f32 %v216, %v289
    %291 = vdwg.mxu0
    %v292 = vxor.u32 %v288, 2147483648
    %v293 = vxor.u32 %v290, 2147483648
    %v294 = vmul.f32 %v292, 1.442695
    %v295 = vpow.pop %v294
    %v296 = vmul.f32 %v293, 1.442695
    %v297 = vpow.pop %v296
    %v298 = vadd.f32 %v295, 1.0
    %v299 = vadd.f32 %v297, 1.0
    %v300 = vrcp.pop %v298
    %v301 = vmul.f32 1.0, %v300
    %v302 = vrcp.pop %v299
    %v303 = vmul.f32 1.0, %v302
    %v304 = vmul.f32 %v303, 2.0
    %v305 = vsub.f32 %v304, 1.0
    %v306 = vmul.f32 %v301, 0.0
    %v307 = vmul.f32 %v301, %v305
    %309 = vrot.lane.b32.xlu0 %v307, 64
    %v310 = vpop.permute.xlu0 %309
    %v312 = vadd.f32 %v306, %v310
    %v313 = vtanh.pop %v312
    %v314 = vmul.f32 %v303, %v313
    %v315 = vld [vmem:[#allocation2 + $0x10] sm:$0xff]
    %v316 = vld [vmem:[#allocation2 + $0x18] sm:$0xff]
    %v317 = vadd.f32 %v315, %v211
    %v318 = vadd.f32 %v316, %v212
    %320 = vrot.lane.b32.xlu0 %v314, 64
    %v321 = vpop.permute.xlu0 %320
    %v322 = vsel %vm217, %v321, 0
    %324 = vmatprep.subr.mxu0 %v30
    %325 = vmatpush1.msra.mxu0 %v29
    %326 = vmatprep.subr.mxu0 %v32
    %327 = vmatpush1.msra.mxu0 %v31
    %328 = vmatprep.subr.mxu0 %v34
    %329 = vmatpush1.msra.mxu0 %v33
    %330 = vmatprep.subr.mxu0 %v36
    %331 = vmatpush1.msra.mxu0 %v35
    %332 = vmatprep.subr.mxu0 %v38
    %333 = vmatpush1.msra.mxu0 %v37
    %334 = vmatprep.subr.mxu0 %v40
    %335 = vmatpush1.msra.mxu0 %v39
    %336 = vmatprep.subr.mxu0 %v42
    %337 = vmatpush1.msra.mxu0 %v41
    %338 = vmatprep.subr.mxu0 %v44
    %339 = vmatpush1.msra.mxu0 %v43
    %340 = vmatprep.subr.mxu0 0.0
    %341 = vmatpush1.msra.mxu0 0.0
    %342 = vmatprep.subr.mxu0 0.0
    %343 = vmatpush1.msra.mxu0 0.0
    %344 = vmatprep.subr.mxu0 0.0
    %345 = vmatpush1.msra.mxu0 0.0
    %346 = vmatprep.subr.mxu0 0.0
    %347 = vmatpush1.msra.mxu0 0.0
    %348 = vmatprep.subr.mxu0 0.0
    %349 = vmatpush1.msra.mxu0 0.0
    %350 = vmatprep.subr.mxu0 0.0
    %351 = vmatpush1.msra.mxu0 0.0
    %352 = vmatprep.subr.mxu0 0.0
    %353 = vmatpush1.msra.mxu0 0.0
    %354 = vmatprep.subr.mxu0 0.0
    %355 = vmatpush1.msra.mxu0 0.0
    %356 = vmatprep.subr.mxu0 0.0
    %357 = vmatpush1.msra.mxu0 0.0
    %358 = vmatprep.subr.mxu0 0.0
    %359 = vmatpush1.msra.mxu0 0.0
    %360 = vmatprep.subr.mxu0 0.0
    %361 = vmatpush1.msra.mxu0 0.0
    %362 = vmatprep.subr.mxu0 0.0
    %363 = vmatpush1.msra.mxu0 0.0
    %364 = vmatprep.subr.mxu0 0.0
    %365 = vmatpush1.msra.mxu0 0.0
    %366 = vmatprep.subr.mxu0 0.0
    %367 = vmatpush1.msra.mxu0 0.0
    %368 = vmatprep.subr.mxu0 0.0
    %369 = vmatpush1.msra.mxu0 0.0
    %370 = vmatprep.subr.mxu0 0.0
    %371 = vmatpush1.msra.mxu0 0.0
    %372 = vmatprep.subr.mxu0 0.0
    %373 = vmatpush1.msra.mxu0 0.0
    %374 = vmatprep.subr.mxu0 0.0
    %375 = vmatpush1.msra.mxu0 0.0
    %376 = vmatprep.subr.mxu0 0.0
    %377 = vmatpush1.msra.mxu0 0.0
    %378 = vmatprep.subr.mxu0 0.0
    %379 = vmatpush1.msra.mxu0 0.0
    %380 = vmatprep.subr.mxu0 0.0
    %381 = vmatpush1.msra.mxu0 0.0
    %382 = vmatprep.subr.mxu0 0.0
    %383 = vmatpush1.msra.mxu0 0.0
    %384 = vmatprep.subr.mxu0 0.0
    %385 = vmatpush1.msra.mxu0 0.0
    %386 = vmatprep.subr.mxu0 0.0
    %387 = vmatpush1.msra.mxu0 0.0
    %388 = vmatprep.mubr.f32.mxu0 0.0
    %389 = vmatmul.mubr.f32.gmra.mrb[0].mxu0 %v322
    %v390 = vpop.f32.mrb[0].mxu0
    %v391 = vadd.f32 %v317, %v390
    %v392 = vpop.f32.mrb[0].mxu0
    %v393 = vadd.f32 %v318, %v392
    %394 = vdwg.mxu0
    %v395 = vxor.u32 %v391, 2147483648
    %v396 = vxor.u32 %v393, 2147483648
    %v397 = vmul.f32 %v395, 1.442695
    %v398 = vpow.pop %v397
    %v399 = vmul.f32 %v396, 1.442695
    %v400 = vpow.pop %v399
    %v401 = vadd.f32 %v398, 1.0
    %v402 = vadd.f32 %v400, 1.0
    %v403 = vrcp.pop %v401
    %v404 = vmul.f32 1.0, %v403
    %v405 = vrcp.pop %v402
    %v406 = vmul.f32 1.0, %v405
    %v407 = vmul.f32 %v406, 2.0
    %v408 = vsub.f32 %v407, 1.0
    %v409 = vmul.f32 %v404, %v312
    %v410 = vmul.f32 %v404, %v408
    %412 = vrot.lane.b32.xlu0 %v410, 64
    %v413 = vpop.permute.xlu0 %412
    %v415 = vadd.f32 %v409, %v413
    %v416 = vtanh.pop %v415
    %v417 = vmul.f32 %v406, %v416
    %v418 = vld [vmem:[#allocation2 + $0x20] sm:$0xff]
    %v419 = vld [vmem:[#allocation2 + $0x28] sm:$0xff]
    %v420 = vadd.f32 %v418, %v211
    %v421 = vadd.f32 %v419, %v212
    %423 = vrot.lane.b32.xlu0 %v417, 64
    %v424 = vpop.permute.xlu0 %423
    %v425 = vsel %vm217, %v424, 0
    %427 = vmatprep.subr.mxu0 %v30
    %428 = vmatpush1.msra.mxu0 %v29
    %429 = vmatprep.subr.mxu0 %v32
    %430 = vmatpush1.msra.mxu0 %v31
    %431 = vmatprep.subr.mxu0 %v34
    %432 = vmatpush1.msra.mxu0 %v33
    %433 = vmatprep.subr.mxu0 %v36
    %434 = vmatpush1.msra.mxu0 %v35
    %435 = vmatprep.subr.mxu0 %v38
    %436 = vmatpush1.msra.mxu0 %v37
    %437 = vmatprep.subr.mxu0 %v40
    %438 = vmatpush1.msra.mxu0 %v39
    %439 = vmatprep.subr.mxu0 %v42
    %440 = vmatpush1.msra.mxu0 %v41
    %441 = vmatprep.subr.mxu0 %v44
    %442 = vmatpush1.msra.mxu0 %v43
    %443 = vmatprep.subr.mxu0 0.0
    %444 = vmatpush1.msra.mxu0 0.0
    %445 = vmatprep.subr.mxu0 0.0
    %446 = vmatpush1.msra.mxu0 0.0
    %447 = vmatprep.subr.mxu0 0.0
    %448 = vmatpush1.msra.mxu0 0.0
    %449 = vmatprep.subr.mxu0 0.0
    %450 = vmatpush1.msra.mxu0 0.0
    %451 = vmatprep.subr.mxu0 0.0
    %452 = vmatpush1.msra.mxu0 0.0
    %453 = vmatprep.subr.mxu0 0.0
    %454 = vmatpush1.msra.mxu0 0.0
    %455 = vmatprep.subr.mxu0 0.0
    %456 = vmatpush1.msra.mxu0 0.0
    %457 = vmatprep.subr.mxu0 0.0
    %458 = vmatpush1.msra.mxu0 0.0
    %459 = vmatprep.subr.mxu0 0.0
    %460 = vmatpush1.msra.mxu0 0.0
    %461 = vmatprep.subr.mxu0 0.0
    %462 = vmatpush1.msra.mxu0 0.0
    %463 = vmatprep.subr.mxu0 0.0
    %464 = vmatpush1.msra.mxu0 0.0
    %465 = vmatprep.subr.mxu0 0.0
    %466 = vmatpush1.msra.mxu0 0.0
    %467 = vmatprep.subr.mxu0 0.0
    %468 = vmatpush1.msra.mxu0 0.0
    %469 = vmatprep.subr.mxu0 0.0
    %470 = vmatpush1.msra.mxu0 0.0
    %471 = vmatprep.subr.mxu0 0.0
    %472 = vmatpush1.msra.mxu0 0.0
    %473 = vmatprep.subr.mxu0 0.0
    %474 = vmatpush1.msra.mxu0 0.0
    %475 = vmatprep.subr.mxu0 0.0
    %476 = vmatpush1.msra.mxu0 0.0
    %477 = vmatprep.subr.mxu0 0.0
    %478 = vmatpush1.msra.mxu0 0.0
    %479 = vmatprep.subr.mxu0 0.0
    %480 = vmatpush1.msra.mxu0 0.0
    %481 = vmatprep.subr.mxu0 0.0
    %482 = vmatpush1.msra.mxu0 0.0
    %483 = vmatprep.subr.mxu0 0.0
    %484 = vmatpush1.msra.mxu0 0.0
    %485 = vmatprep.subr.mxu0 0.0
    %486 = vmatpush1.msra.mxu0 0.0
    %487 = vmatprep.subr.mxu0 0.0
    %488 = vmatpush1.msra.mxu0 0.0
    %489 = vmatprep.subr.mxu0 0.0
    %490 = vmatpush1.msra.mxu0 0.0
    %491 = vmatprep.mubr.f32.mxu0 0.0
    %492 = vmatmul.mubr.f32.gmra.mrb[0].mxu0 %v425
    %v493 = vpop.f32.mrb[0].mxu0
    %v494 = vadd.f32 %v420, %v493
    %v495 = vpop.f32.mrb[0].mxu0
    %v496 = vadd.f32 %v421, %v495
    %497 = vdwg.mxu0
    %v498 = vxor.u32 %v494, 2147483648
    %v499 = vxor.u32 %v496, 2147483648
    %v500 = vmul.f32 %v498, 1.442695
    %v501 = vpow.pop %v500
    %v502 = vmul.f32 %v499, 1.442695
    %v503 = vpow.pop %v502
    %v504 = vadd.f32 %v501, 1.0
    %v505 = vadd.f32 %v503, 1.0
    %v506 = vrcp.pop %v504
    %v507 = vmul.f32 1.0, %v506
    %v508 = vrcp.pop %v505
    %v509 = vmul.f32 1.0, %v508
    %v510 = vmul.f32 %v509, 2.0
    %v511 = vsub.f32 %v510, 1.0
    %v512 = vmul.f32 %v507, %v415
    %v513 = vmul.f32 %v507, %v511
    %515 = vrot.lane.b32.xlu0 %v513, 64
    %v516 = vpop.permute.xlu0 %515
    %v518 = vadd.f32 %v512, %v516
    %v519 = vtanh.pop %v518
    %v520 = vmul.f32 %v509, %v519
    %v521 = vld [vmem:[#allocation2 + $0x30] sm:$0xff]
    %v522 = vld [vmem:[#allocation2 + $0x38] sm:$0xff]
    %v523 = vadd.f32 %v521, %v211
    %v524 = vadd.f32 %v522, %v212
    %526 = vrot.lane.b32.xlu0 %v520, 64
    %v527 = vpop.permute.xlu0 %526
    %v528 = vsel %vm217, %v527, 0
    %530 = vmatprep.subr.mxu0 %v30
    %531 = vmatpush1.msra.mxu0 %v29
    %532 = vmatprep.subr.mxu0 %v32
    %533 = vmatpush1.msra.mxu0 %v31
    %534 = vmatprep.subr.mxu0 %v34
    %535 = vmatpush1.msra.mxu0 %v33
    %536 = vmatprep.subr.mxu0 %v36
    %537 = vmatpush1.msra.mxu0 %v35
    %538 = vmatprep.subr.mxu0 %v38
    %539 = vmatpush1.msra.mxu0 %v37
    %540 = vmatprep.subr.mxu0 %v40
    %541 = vmatpush1.msra.mxu0 %v39
    %542 = vmatprep.subr.mxu0 %v42
    %543 = vmatpush1.msra.mxu0 %v41
    %544 = vmatprep.subr.mxu0 %v44
    %545 = vmatpush1.msra.mxu0 %v43
    %546 = vmatprep.subr.mxu0 0.0
    %547 = vmatpush1.msra.mxu0 0.0
    %548 = vmatprep.subr.mxu0 0.0
    %549 = vmatpush1.msra.mxu0 0.0
    %550 = vmatprep.subr.mxu0 0.0
    %551 = vmatpush1.msra.mxu0 0.0
    %552 = vmatprep.subr.mxu0 0.0
    %553 = vmatpush1.msra.mxu0 0.0
    %554 = vmatprep.subr.mxu0 0.0
    %555 = vmatpush1.msra.mxu0 0.0
    %556 = vmatprep.subr.mxu0 0.0
    %557 = vmatpush1.msra.mxu0 0.0
    %558 = vmatprep.subr.mxu0 0.0
    %559 = vmatpush1.msra.mxu0 0.0
    %560 = vmatprep.subr.mxu0 0.0
    %561 = vmatpush1.msra.mxu0 0.0
    %562 = vmatprep.subr.mxu0 0.0
    %563 = vmatpush1.msra.mxu0 0.0
    %564 = vmatprep.subr.mxu0 0.0
    %565 = vmatpush1.msra.mxu0 0.0
    %566 = vmatprep.subr.mxu0 0.0
    %567 = vmatpush1.msra.mxu0 0.0
    %568 = vmatprep.subr.mxu0 0.0
    %569 = vmatpush1.msra.mxu0 0.0
    %570 = vmatprep.subr.mxu0 0.0
    %571 = vmatpush1.msra.mxu0 0.0
    %572 = vmatprep.subr.mxu0 0.0
    %573 = vmatpush1.msra.mxu0 0.0
    %574 = vmatprep.subr.mxu0 0.0
    %575 = vmatpush1.msra.mxu0 0.0
    %576 = vmatprep.subr.mxu0 0.0
    %577 = vmatpush1.msra.mxu0 0.0
    %578 = vmatprep.subr.mxu0 0.0
    %579 = vmatpush1.msra.mxu0 0.0
    %580 = vmatprep.subr.mxu0 0.0
    %581 = vmatpush1.msra.mxu0 0.0
    %582 = vmatprep.subr.mxu0 0.0
    %583 = vmatpush1.msra.mxu0 0.0
    %584 = vmatprep.subr.mxu0 0.0
    %585 = vmatpush1.msra.mxu0 0.0
    %586 = vmatprep.subr.mxu0 0.0
    %587 = vmatpush1.msra.mxu0 0.0
    %588 = vmatprep.subr.mxu0 0.0
    %589 = vmatpush1.msra.mxu0 0.0
    %590 = vmatprep.subr.mxu0 0.0
    %591 = vmatpush1.msra.mxu0 0.0
    %592 = vmatprep.subr.mxu0 0.0
    %593 = vmatpush1.msra.mxu0 0.0
    %594 = vmatprep.mubr.f32.mxu0 0.0
    %595 = vmatmul.mubr.f32.gmra.mrb[0].mxu0 %v528
    %v596 = vpop.f32.mrb[0].mxu0
    %v597 = vadd.f32 %v523, %v596
    %v598 = vpop.f32.mrb[0].mxu0
    %v599 = vadd.f32 %v524, %v598
    %600 = vdwg.mxu0
    %v601 = vxor.u32 %v597, 2147483648
    %v602 = vxor.u32 %v599, 2147483648
    %v603 = vmul.f32 %v601, 1.442695
    %v604 = vpow.pop %v603
    %v605 = vmul.f32 %v602, 1.442695
    %v606 = vpow.pop %v605
    %v607 = vadd.f32 %v604, 1.0
    %v608 = vadd.f32 %v606, 1.0
    %v609 = vrcp.pop %v607
    %v610 = vmul.f32 1.0, %v609
    %v611 = vrcp.pop %v608
    %v612 = vmul.f32 1.0, %v611
    %v613 = vmul.f32 %v612, 2.0
    %v614 = vsub.f32 %v613, 1.0
    %v615 = vmul.f32 %v610, %v518
    %v616 = vmul.f32 %v610, %v614
    %618 = vrot.lane.b32.xlu0 %v616, 64
    %v619 = vpop.permute.xlu0 %618
    %v621 = vadd.f32 %v615, %v619
    %v622 = vtanh.pop %v621
    %v623 = vmul.f32 %v612, %v622
    %v624 = vld [vmem:[#allocation2 + $0x40] sm:$0xff]
    %v625 = vld [vmem:[#allocation2 + $0x48] sm:$0xff]
    %v626 = vadd.f32 %v624, %v211
    %v627 = vadd.f32 %v625, %v212
    %629 = vrot.lane.b32.xlu0 %v623, 64
    %v630 = vpop.permute.xlu0 %629
    %v631 = vsel %vm217, %v630, 0
    %633 = vmatprep.subr.mxu0 %v30
    %634 = vmatpush1.msra.mxu0 %v29
    %635 = vmatprep.subr.mxu0 %v32
    %636 = vmatpush1.msra.mxu0 %v31
    %637 = vmatprep.subr.mxu0 %v34
    %638 = vmatpush1.msra.mxu0 %v33
    %639 = vmatprep.subr.mxu0 %v36
    %640 = vmatpush1.msra.mxu0 %v35
    %641 = vmatprep.subr.mxu0 %v38
    %642 = vmatpush1.msra.mxu0 %v37
    %643 = vmatprep.subr.mxu0 %v40
    %644 = vmatpush1.msra.mxu0 %v39
    %645 = vmatprep.subr.mxu0 %v42
    %646 = vmatpush1.msra.mxu0 %v41
    %647 = vmatprep.subr.mxu0 %v44
    %648 = vmatpush1.msra.mxu0 %v43
    %649 = vmatprep.subr.mxu0 0.0
    %650 = vmatpush1.msra.mxu0 0.0
    %651 = vmatprep.subr.mxu0 0.0
    %652 = vmatpush1.msra.mxu0 0.0
    %653 = vmatprep.subr.mxu0 0.0
    %654 = vmatpush1.msra.mxu0 0.0
    %655 = vmatprep.subr.mxu0 0.0
    %656 = vmatpush1.msra.mxu0 0.0
    %657 = vmatprep.subr.mxu0 0.0
    %658 = vmatpush1.msra.mxu0 0.0
    %659 = vmatprep.subr.mxu0 0.0
    %660 = vmatpush1.msra.mxu0 0.0
    %661 = vmatprep.subr.mxu0 0.0
    %662 = vmatpush1.msra.mxu0 0.0
    %663 = vmatprep.subr.mxu0 0.0
    %664 = vmatpush1.msra.mxu0 0.0
    %665 = vmatprep.subr.mxu0 0.0
    %666 = vmatpush1.msra.mxu0 0.0
    %667 = vmatprep.subr.mxu0 0.0
    %668 = vmatpush1.msra.mxu0 0.0
    %669 = vmatprep.subr.mxu0 0.0
    %670 = vmatpush1.msra.mxu0 0.0
    %671 = vmatprep.subr.mxu0 0.0
    %672 = vmatpush1.msra.mxu0 0.0
    %673 = vmatprep.subr.mxu0 0.0
    %674 = vmatpush1.msra.mxu0 0.0
    %675 = vmatprep.subr.mxu0 0.0
    %676 = vmatpush1.msra.mxu0 0.0
    %677 = vmatprep.subr.mxu0 0.0
    %678 = vmatpush1.msra.mxu0 0.0
    %679 = vmatprep.subr.mxu0 0.0
    %680 = vmatpush1.msra.mxu0 0.0
    %681 = vmatprep.subr.mxu0 0.0
    %682 = vmatpush1.msra.mxu0 0.0
    %683 = vmatprep.subr.mxu0 0.0
    %684 = vmatpush1.msra.mxu0 0.0
    %685 = vmatprep.subr.mxu0 0.0
    %686 = vmatpush1.msra.mxu0 0.0
    %687 = vmatprep.subr.mxu0 0.0
    %688 = vmatpush1.msra.mxu0 0.0
    %689 = vmatprep.subr.mxu0 0.0
    %690 = vmatpush1.msra.mxu0 0.0
    %691 = vmatprep.subr.mxu0 0.0
    %692 = vmatpush1.msra.mxu0 0.0
    %693 = vmatprep.subr.mxu0 0.0
    %694 = vmatpush1.msra.mxu0 0.0
    %695 = vmatprep.subr.mxu0 0.0
    %696 = vmatpush1.msra.mxu0 0.0
    %697 = vmatprep.mubr.f32.mxu0 0.0
    %698 = vmatmul.mubr.f32.gmra.mrb[0].mxu0 %v631
    %v699 = vpop.f32.mrb[0].mxu0
    %v700 = vadd.f32 %v626, %v699
    %v701 = vpop.f32.mrb[0].mxu0
    %v702 = vadd.f32 %v627, %v701
    %703 = vdwg.mxu0
    %v704 = vxor.u32 %v700, 2147483648
    %v705 = vxor.u32 %v702, 2147483648
    %v706 = vmul.f32 %v704, 1.442695
    %v707 = vpow.pop %v706
    %v708 = vmul.f32 %v705, 1.442695
    %v709 = vpow.pop %v708
    %v710 = vadd.f32 %v707, 1.0
    %v711 = vadd.f32 %v709, 1.0
    %v712 = vrcp.pop %v710
    %v713 = vmul.f32 1.0, %v712
    %v714 = vrcp.pop %v711
    %v715 = vmul.f32 1.0, %v714
    %v716 = vmul.f32 %v715, 2.0
    %v717 = vsub.f32 %v716, 1.0
    %v718 = vmul.f32 %v713, %v621
    %v719 = vmul.f32 %v713, %v717
    %721 = vrot.lane.b32.xlu0 %v719, 64
    %v722 = vpop.permute.xlu0 %721
    %v724 = vadd.f32 %v718, %v722
    %v725 = vtanh.pop %v724
    %v726 = vmul.f32 %v715, %v725
    %v727 = vld [vmem:[#allocation2 + $0x50] sm:$0xff]
    %v728 = vld [vmem:[#allocation2 + $0x58] sm:$0xff]
    %v729 = vadd.f32 %v727, %v211
    %v730 = vadd.f32 %v728, %v212
    %732 = vrot.lane.b32.xlu0 %v726, 64
    %v733 = vpop.permute.xlu0 %732
    %v734 = vsel %vm217, %v733, 0
    %736 = vmatprep.subr.mxu0 %v30
    %737 = vmatpush1.msra.mxu0 %v29
    %738 = vmatprep.subr.mxu0 %v32
    %739 = vmatpush1.msra.mxu0 %v31
    %740 = vmatprep.subr.mxu0 %v34
    %741 = vmatpush1.msra.mxu0 %v33
    %742 = vmatprep.subr.mxu0 %v36
    %743 = vmatpush1.msra.mxu0 %v35
    %744 = vmatprep.subr.mxu0 %v38
    %745 = vmatpush1.msra.mxu0 %v37
    %746 = vmatprep.subr.mxu0 %v40
    %747 = vmatpush1.msra.mxu0 %v39
    %748 = vmatprep.subr.mxu0 %v42
    %749 = vmatpush1.msra.mxu0 %v41
    %750 = vmatprep.subr.mxu0 %v44
    %751 = vmatpush1.msra.mxu0 %v43
    %752 = vmatprep.subr.mxu0 0.0
    %753 = vmatpush1.msra.mxu0 0.0
    %754 = vmatprep.subr.mxu0 0.0
    %755 = vmatpush1.msra.mxu0 0.0
    %756 = vmatprep.subr.mxu0 0.0
    %757 = vmatpush1.msra.mxu0 0.0
    %758 = vmatprep.subr.mxu0 0.0
    %759 = vmatpush1.msra.mxu0 0.0
    %760 = vmatprep.subr.mxu0 0.0
    %761 = vmatpush1.msra.mxu0 0.0
    %762 = vmatprep.subr.mxu0 0.0
    %763 = vmatpush1.msra.mxu0 0.0
    %764 = vmatprep.subr.mxu0 0.0
    %765 = vmatpush1.msra.mxu0 0.0
    %766 = vmatprep.subr.mxu0 0.0
    %767 = vmatpush1.msra.mxu0 0.0
    %768 = vmatprep.subr.mxu0 0.0
    %769 = vmatpush1.msra.mxu0 0.0
    %770 = vmatprep.subr.mxu0 0.0
    %771 = vmatpush1.msra.mxu0 0.0
    %772 = vmatprep.subr.mxu0 0.0
    %773 = vmatpush1.msra.mxu0 0.0
    %774 = vmatprep.subr.mxu0 0.0
    %775 = vmatpush1.msra.mxu0 0.0
    %776 = vmatprep.subr.mxu0 0.0
    %777 = vmatpush1.msra.mxu0 0.0
    %778 = vmatprep.subr.mxu0 0.0
    %779 = vmatpush1.msra.mxu0 0.0
    %780 = vmatprep.subr.mxu0 0.0
    %781 = vmatpush1.msra.mxu0 0.0
    %782 = vmatprep.subr.mxu0 0.0
    %783 = vmatpush1.msra.mxu0 0.0
    %784 = vmatprep.subr.mxu0 0.0
    %785 = vmatpush1.msra.mxu0 0.0
    %786 = vmatprep.subr.mxu0 0.0
    %787 = vmatpush1.msra.mxu0 0.0
    %788 = vmatprep.subr.mxu0 0.0
    %789 = vmatpush1.msra.mxu0 0.0
    %790 = vmatprep.subr.mxu0 0.0
    %791 = vmatpush1.msra.mxu0 0.0
    %792 = vmatprep.subr.mxu0 0.0
    %793 = vmatpush1.msra.mxu0 0.0
    %794 = vmatprep.subr.mxu0 0.0
    %795 = vmatpush1.msra.mxu0 0.0
    %796 = vmatprep.subr.mxu0 0.0
    %797 = vmatpush1.msra.mxu0 0.0
    %798 = vmatprep.subr.mxu0 0.0
    %799 = vmatpush1.msra.mxu0 0.0
    %800 = vmatprep.mubr.f32.mxu0 0.0
    %801 = vmatmul.mubr.f32.gmra.mrb[0].mxu0 %v734
    %v802 = vpop.f32.mrb[0].mxu0
    %v803 = vadd.f32 %v729, %v802
    %v804 = vpop.f32.mrb[0].mxu0
    %v805 = vadd.f32 %v730, %v804
    %806 = vdwg.mxu0
    %v807 = vxor.u32 %v803, 2147483648
    %v808 = vxor.u32 %v805, 2147483648
    %v809 = vmul.f32 %v807, 1.442695
    %v810 = vpow.pop %v809
    %v811 = vmul.f32 %v808, 1.442695
    %v812 = vpow.pop %v811
    %v813 = vadd.f32 %v810, 1.0
    %v814 = vadd.f32 %v812, 1.0
    %v815 = vrcp.pop %v813
    %v816 = vmul.f32 1.0, %v815
    %v817 = vrcp.pop %v814
    %v818 = vmul.f32 1.0, %v817
    %v819 = vmul.f32 %v818, 2.0
    %v820 = vsub.f32 %v819, 1.0
    %v821 = vmul.f32 %v816, %v724
    %v822 = vmul.f32 %v816, %v820
    %824 = vrot.lane.b32.xlu0 %v822, 64
    %v825 = vpop.permute.xlu0 %824
    %v827 = vadd.f32 %v821, %v825
    %v828 = vtanh.pop %v827
    %v829 = vmul.f32 %v818, %v828
    %v830 = vld [vmem:[#allocation2 + $0x60] sm:$0xff]
    %v831 = vld [vmem:[#allocation2 + $0x68] sm:$0xff]
    %v832 = vadd.f32 %v830, %v211
    %v833 = vadd.f32 %v831, %v212
    %835 = vrot.lane.b32.xlu0 %v829, 64
    %v836 = vpop.permute.xlu0 %835
    %v837 = vsel %vm217, %v836, 0
    %839 = vmatprep.subr.mxu0 %v30
    %840 = vmatpush1.msra.mxu0 %v29
    %841 = vmatprep.subr.mxu0 %v32
    %842 = vmatpush1.msra.mxu0 %v31
    %843 = vmatprep.subr.mxu0 %v34
    %844 = vmatpush1.msra.mxu0 %v33
    %845 = vmatprep.subr.mxu0 %v36
    %846 = vmatpush1.msra.mxu0 %v35
    %847 = vmatprep.subr.mxu0 %v38
    %848 = vmatpush1.msra.mxu0 %v37
    %849 = vmatprep.subr.mxu0 %v40
    %850 = vmatpush1.msra.mxu0 %v39
    %851 = vmatprep.subr.mxu0 %v42
    %852 = vmatpush1.msra.mxu0 %v41
    %853 = vmatprep.subr.mxu0 %v44
    %854 = vmatpush1.msra.mxu0 %v43
    %855 = vmatprep.subr.mxu0 0.0
    %856 = vmatpush1.msra.mxu0 0.0
    %857 = vmatprep.subr.mxu0 0.0
    %858 = vmatpush1.msra.mxu0 0.0
    %859 = vmatprep.subr.mxu0 0.0
    %860 = vmatpush1.msra.mxu0 0.0
    %861 = vmatprep.subr.mxu0 0.0
    %862 = vmatpush1.msra.mxu0 0.0
    %863 = vmatprep.subr.mxu0 0.0
    %864 = vmatpush1.msra.mxu0 0.0
    %865 = vmatprep.subr.mxu0 0.0
    %866 = vmatpush1.msra.mxu0 0.0
    %867 = vmatprep.subr.mxu0 0.0
    %868 = vmatpush1.msra.mxu0 0.0
    %869 = vmatprep.subr.mxu0 0.0
    %870 = vmatpush1.msra.mxu0 0.0
    %871 = vmatprep.subr.mxu0 0.0
    %872 = vmatpush1.msra.mxu0 0.0
    %873 = vmatprep.subr.mxu0 0.0
    %874 = vmatpush1.msra.mxu0 0.0
    %875 = vmatprep.subr.mxu0 0.0
    %876 = vmatpush1.msra.mxu0 0.0
    %877 = vmatprep.subr.mxu0 0.0
    %878 = vmatpush1.msra.mxu0 0.0
    %879 = vmatprep.subr.mxu0 0.0
    %880 = vmatpush1.msra.mxu0 0.0
    %881 = vmatprep.subr.mxu0 0.0
    %882 = vmatpush1.msra.mxu0 0.0
    %883 = vmatprep.subr.mxu0 0.0
    %884 = vmatpush1.msra.mxu0 0.0
    %885 = vmatprep.subr.mxu0 0.0
    %886 = vmatpush1.msra.mxu0 0.0
    %887 = vmatprep.subr.mxu0 0.0
    %888 = vmatpush1.msra.mxu0 0.0
    %889 = vmatprep.subr.mxu0 0.0
    %890 = vmatpush1.msra.mxu0 0.0
    %891 = vmatprep.subr.mxu0 0.0
    %892 = vmatpush1.msra.mxu0 0.0
    %893 = vmatprep.subr.mxu0 0.0
    %894 = vmatpush1.msra.mxu0 0.0
    %895 = vmatprep.subr.mxu0 0.0
    %896 = vmatpush1.msra.mxu0 0.0
    %897 = vmatprep.subr.mxu0 0.0
    %898 = vmatpush1.msra.mxu0 0.0
    %899 = vmatprep.subr.mxu0 0.0
    %900 = vmatpush1.msra.mxu0 0.0
    %901 = vmatprep.subr.mxu0 0.0
    %902 = vmatpush1.msra.mxu0 0.0
    %903 = vmatprep.mubr.f32.mxu0 0.0
    %904 = vmatmul.mubr.f32.gmra.mrb[0].mxu0 %v837
    %v905 = vpop.f32.mrb[0].mxu0
    %v906 = vadd.f32 %v832, %v905
    %v907 = vpop.f32.mrb[0].mxu0
    %v908 = vadd.f32 %v833, %v907
    %909 = vdwg.mxu0
    %v910 = vxor.u32 %v906, 2147483648
    %v911 = vxor.u32 %v908, 2147483648
    %v912 = vmul.f32 %v910, 1.442695
    %v913 = vpow.pop %v912
    %v914 = vmul.f32 %v911, 1.442695
    %v915 = vpow.pop %v914
    %v916 = vadd.f32 %v913, 1.0
    %v917 = vadd.f32 %v915, 1.0
    %v918 = vrcp.pop %v916
    %v919 = vmul.f32 1.0, %v918
    %v920 = vrcp.pop %v917
    %v921 = vmul.f32 1.0, %v920
    %v922 = vmul.f32 %v921, 2.0
    %v923 = vsub.f32 %v922, 1.0
    %v924 = vmul.f32 %v919, %v827
    %v925 = vmul.f32 %v919, %v923
    %927 = vrot.lane.b32.xlu0 %v925, 64
    %v928 = vpop.permute.xlu0 %927
    %v930 = vadd.f32 %v924, %v928
    %v931 = vtanh.pop %v930
    %v932 = vmul.f32 %v921, %v931
    %v933 = vld [vmem:[#allocation2 + $0x70] sm:$0xff]
    %v934 = vld [vmem:[#allocation2 + $0x78] sm:$0xff]
    %v935 = vadd.f32 %v933, %v211
    %v936 = vadd.f32 %v934, %v212
    %938 = vrot.lane.b32.xlu0 %v932, 64
    %v939 = vpop.permute.xlu0 %938
    %v940 = vsel %vm217, %v939, 0
    %942 = vmatprep.subr.mxu0 %v30
    %943 = vmatpush1.msra.mxu0 %v29
    %944 = vmatprep.subr.mxu0 %v32
    %945 = vmatpush1.msra.mxu0 %v31
    %946 = vmatprep.subr.mxu0 %v34
    %947 = vmatpush1.msra.mxu0 %v33
    %948 = vmatprep.subr.mxu0 %v36
    %949 = vmatpush1.msra.mxu0 %v35
    %950 = vmatprep.subr.mxu0 %v38
    %951 = vmatpush1.msra.mxu0 %v37
    %952 = vmatprep.subr.mxu0 %v40
    %953 = vmatpush1.msra.mxu0 %v39
    %954 = vmatprep.subr.mxu0 %v42
    %955 = vmatpush1.msra.mxu0 %v41
    %956 = vmatprep.subr.mxu0 %v44
    %957 = vmatpush1.msra.mxu0 %v43
    %958 = vmatprep.subr.mxu0 0.0
    %959 = vmatpush1.msra.mxu0 0.0
    %960 = vmatprep.subr.mxu0 0.0
    %961 = vmatpush1.msra.mxu0 0.0
    %962 = vmatprep.subr.mxu0 0.0
    %963 = vmatpush1.msra.mxu0 0.0
    %964 = vmatprep.subr.mxu0 0.0
    %965 = vmatpush1.msra.mxu0 0.0
    %966 = vmatprep.subr.mxu0 0.0
    %967 = vmatpush1.msra.mxu0 0.0
    %968 = vmatprep.subr.mxu0 0.0
    %969 = vmatpush1.msra.mxu0 0.0
    %970 = vmatprep.subr.mxu0 0.0
    %971 = vmatpush1.msra.mxu0 0.0
    %972 = vmatprep.subr.mxu0 0.0
    %973 = vmatpush1.msra.mxu0 0.0
    %974 = vmatprep.subr.mxu0 0.0
    %975 = vmatpush1.msra.mxu0 0.0
    %976 = vmatprep.subr.mxu0 0.0
    %977 = vmatpush1.msra.mxu0 0.0
    %978 = vmatprep.subr.mxu0 0.0
    %979 = vmatpush1.msra.mxu0 0.0
    %980 = vmatprep.subr.mxu0 0.0
    %981 = vmatpush1.msra.mxu0 0.0
    %982 = vmatprep.subr.mxu0 0.0
    %983 = vmatpush1.msra.mxu0 0.0
    %984 = vmatprep.subr.mxu0 0.0
    %985 = vmatpush1.msra.mxu0 0.0
    %986 = vmatprep.subr.mxu0 0.0
    %987 = vmatpush1.msra.mxu0 0.0
    %988 = vmatprep.subr.mxu0 0.0
    %989 = vmatpush1.msra.mxu0 0.0
    %990 = vmatprep.subr.mxu0 0.0
    %991 = vmatpush1.msra.mxu0 0.0
    %992 = vmatprep.subr.mxu0 0.0
    %993 = vmatpush1.msra.mxu0 0.0
    %994 = vmatprep.subr.mxu0 0.0
    %995 = vmatpush1.msra.mxu0 0.0
    %996 = vmatprep.subr.mxu0 0.0
    %997 = vmatpush1.msra.mxu0 0.0
    %998 = vmatprep.subr.mxu0 0.0
    %999 = vmatpush1.msra.mxu0 0.0
    %1000 = vmatprep.subr.mxu0 0.0
    %1001 = vmatpush1.msra.mxu0 0.0
    %1002 = vmatprep.subr.mxu0 0.0
    %1003 = vmatpush1.msra.mxu0 0.0
    %1004 = vmatprep.subr.mxu0 0.0
    %1005 = vmatpush1.msra.mxu0 0.0
    %1006 = vmatprep.mubr.f32.mxu0 0.0
    %1007 = vmatmul.mubr.f32.gmra.mrb[0].mxu0 %v940
    %v1008 = vpop.f32.mrb[0].mxu0
    %v1009 = vadd.f32 %v935, %v1008
    %v1010 = vpop.f32.mrb[0].mxu0
    %v1011 = vadd.f32 %v936, %v1010
    %1012 = vdwg.mxu0
    %v1013 = vxor.u32 %v1009, 2147483648
    %v1014 = vxor.u32 %v1011, 2147483648
    %v1015 = vmul.f32 %v1013, 1.442695
    %v1016 = vpow.pop %v1015
    %v1017 = vmul.f32 %v1014, 1.442695
    %v1018 = vpow.pop %v1017
    %v1019 = vadd.f32 %v1016, 1.0
    %v1020 = vadd.f32 %v1018, 1.0
    %v1021 = vrcp.pop %v1019
    %v1022 = vmul.f32 1.0, %v1021
    %v1023 = vrcp.pop %v1020
    %v1024 = vmul.f32 1.0, %v1023
    %v1025 = vmul.f32 %v1024, 2.0
    %v1026 = vsub.f32 %v1025, 1.0
    %v1027 = vmul.f32 %v1022, %v930
    %v1028 = vmul.f32 %v1022, %v1026
    %1030 = vrot.lane.b32.xlu0 %v1028, 64
    %v1031 = vpop.permute.xlu0 %1030
    %v1033 = vadd.f32 %v1027, %v1031
    %v1034 = vtanh.pop %v1033
    %v1035 = vmul.f32 %v1024, %v1034
    %1037 = vrot.lane.b32.xlu0 %v1035, 64
    %v1038 = vpop.permute.xlu0 %1037
    %v1039 = vsel %vm217, %v1038, 0
    %1041 = vmatprep.subr.mxu0 %v30
    %1042 = vmatpush1.msra.mxu0 %v29
    %1043 = vmatprep.subr.mxu0 %v32
    %1044 = vmatpush1.msra.mxu0 %v31
    %1045 = vmatprep.subr.mxu0 %v34
    %1046 = vmatpush1.msra.mxu0 %v33
    %1047 = vmatprep.subr.mxu0 %v36
    %1048 = vmatpush1.msra.mxu0 %v35
    %1049 = vmatprep.subr.mxu0 %v38
    %1050 = vmatpush1.msra.mxu0 %v37
    %1051 = vmatprep.subr.mxu0 %v40
    %1052 = vmatpush1.msra.mxu0 %v39
    %1053 = vmatprep.subr.mxu0 %v42
    %1054 = vmatpush1.msra.mxu0 %v41
    %1055 = vmatprep.subr.mxu0 %v44
    %1056 = vmatpush1.msra.mxu0 %v43
    %1057 = vmatprep.subr.mxu0 0.0
    %1058 = vmatpush1.msra.mxu0 0.0
    %1059 = vmatprep.subr.mxu0 0.0
    %1060 = vmatpush1.msra.mxu0 0.0
    %1061 = vmatprep.subr.mxu0 0.0
    %1062 = vmatpush1.msra.mxu0 0.0
    %1063 = vmatprep.subr.mxu0 0.0
    %1064 = vmatpush1.msra.mxu0 0.0
    %1065 = vmatprep.subr.mxu0 0.0
    %1066 = vmatpush1.msra.mxu0 0.0
    %1067 = vmatprep.subr.mxu0 0.0
    %1068 = vmatpush1.msra.mxu0 0.0
    %1069 = vmatprep.subr.mxu0 0.0
    %1070 = vmatpush1.msra.mxu0 0.0
    %1071 = vmatprep.subr.mxu0 0.0
    %1072 = vmatpush1.msra.mxu0 0.0
    %1073 = vmatprep.subr.mxu0 0.0
    %1074 = vmatpush1.msra.mxu0 0.0
    %1075 = vmatprep.subr.mxu0 0.0
    %1076 = vmatpush1.msra.mxu0 0.0
    %1077 = vmatprep.subr.mxu0 0.0
    %1078 = vmatpush1.msra.mxu0 0.0
    %1079 = vmatprep.subr.mxu0 0.0
    %1080 = vmatpush1.msra.mxu0 0.0
    %1081 = vmatprep.subr.mxu0 0.0
    %1082 = vmatpush1.msra.mxu0 0.0
    %1083 = vmatprep.subr.mxu0 0.0
    %1084 = vmatpush1.msra.mxu0 0.0
    %1085 = vmatprep.subr.mxu0 0.0
    %1086 = vmatpush1.msra.mxu0 0.0
    %1087 = vmatprep.subr.mxu0 0.0
    %1088 = vmatpush1.msra.mxu0 0.0
    %1089 = vmatprep.subr.mxu0 0.0
    %1090 = vmatpush1.msra.mxu0 0.0
    %1091 = vmatprep.subr.mxu0 0.0
    %1092 = vmatpush1.msra.mxu0 0.0
    %1093 = vmatprep.subr.mxu0 0.0
    %1094 = vmatpush1.msra.mxu0 0.0
    %1095 = vmatprep.subr.mxu0 0.0
    %1096 = vmatpush1.msra.mxu0 0.0
    %1097 = vmatprep.subr.mxu0 0.0
    %1098 = vmatpush1.msra.mxu0 0.0
    %1099 = vmatprep.subr.mxu0 0.0
    %1100 = vmatpush1.msra.mxu0 0.0
    %1101 = vmatprep.subr.mxu0 0.0
    %1102 = vmatpush1.msra.mxu0 0.0
    %1103 = vmatprep.subr.mxu0 0.0
    %1104 = vmatpush1.msra.mxu0 0.0
    %1105 = vmatprep.mubr.f32.mxu0 0.0
    %1106 = vmatmul.mubr.f32.gmra.mrb[0].mxu0 %v1039
    %v1107 = vpop.f32.mrb[0].mxu0
    %v1108 = vadd.f32 %v47, %v1107
    %v1109 = vpop.f32.mrb[0].mxu0
    %v1110 = vadd.f32 %v48, %v1109
    %1111 = vdwg.mxu0
    %v1112 = vxor.u32 %v1108, 2147483648
    %v1113 = vxor.u32 %v1110, 2147483648
    %v1114 = vmul.f32 %v1112, 1.442695
    %v1115 = vpow.pop %v1114
    %v1116 = vmul.f32 %v1113, 1.442695
    %v1117 = vpow.pop %v1116
    %v1118 = vadd.f32 %v1115, 1.0
    %v1119 = vadd.f32 %v1117, 1.0
    %v1120 = vrcp.pop %v1118
    %v1121 = vmul.f32 1.0, %v1120
    %v1122 = vrcp.pop %v1119
    %v1123 = vmul.f32 1.0, %v1122
    %v1124 = vmul.f32 %v1123, 2.0
    %v1125 = vsub.f32 %v1124, 1.0
    %v1126 = vmul.f32 %v1121, %v1033
    %v1127 = vmul.f32 %v1121, %v1125
    %1129 = vrot.lane.b32.xlu0 %v1127, 64
    %v1130 = vpop.permute.xlu0 %1129
    %v1132 = vadd.f32 %v1126, %v1130
    %v1133 = vtanh.pop %v1132
    %v1134 = vmul.f32 %v1123, %v1133
    %v1135 = vld [vmem:[#allocation3 + $0xc0] sm:$0xff]
    %v1136 = vld [vmem:[#allocation3 + $0xd0] sm:$0xff]
    %v1137 = vld [vmem:[#allocation3 + $0xe0] sm:$0xff]
    %v1138 = vld [vmem:[#allocation3 + $0xf0] sm:$0xff]
    %v1139 = vld [vmem:[#allocation3 + $0x100] sm:$0xff]
    %1141 = vrot.lane.b32.xlu0 %v1134, 32
    %v1142 = vpop.permute.xlu0 %1141
    %vm1143 = vcmask 261120
    %v1144 = vsel %vm1143, %v1142, 0
    %1146 = vmatprep.subr.mxu0 0.0
    %1147 = vmatpush1.msra.mxu0 %v1135
    %1148 = vmatprep.subr.mxu0 0.0
    %1149 = vmatpush1.msra.mxu0 %v1136
    %1150 = vmatprep.subr.mxu0 0.0
    %1151 = vmatpush1.msra.mxu0 %v1137
    %1152 = vmatprep.subr.mxu0 0.0
    %1153 = vmatpush1.msra.mxu0 %v1138
    %1154 = vmatprep.subr.mxu0 0.0
    %1155 = vmatpush1.msra.mxu0 0.0
    %1156 = vmatprep.subr.mxu0 0.0
    %1157 = vmatpush1.msra.mxu0 0.0
    %1158 = vmatprep.subr.mxu0 0.0
    %1159 = vmatpush1.msra.mxu0 0.0
    %1160 = vmatprep.subr.mxu0 0.0
    %1161 = vmatpush1.msra.mxu0 0.0
    %1162 = vmatprep.subr.mxu0 0.0
    %1163 = vmatpush1.msra.mxu0 0.0
    %1164 = vmatprep.subr.mxu0 0.0
    %1165 = vmatpush1.msra.mxu0 0.0
    %1166 = vmatprep.subr.mxu0 0.0
    %1167 = vmatpush1.msra.mxu0 0.0
    %1168 = vmatprep.subr.mxu0 0.0
    %1169 = vmatpush1.msra.mxu0 0.0
    %1170 = vmatprep.subr.mxu0 0.0
    %1171 = vmatpush1.msra.mxu0 0.0
    %1172 = vmatprep.subr.mxu0 0.0
    %1173 = vmatpush1.msra.mxu0 0.0
    %1174 = vmatprep.subr.mxu0 0.0
    %1175 = vmatpush1.msra.mxu0 0.0
    %1176 = vmatprep.subr.mxu0 0.0
    %1177 = vmatpush1.msra.mxu0 0.0
    %1178 = vmatprep.subr.mxu0 0.0
    %1179 = vmatpush1.msra.mxu0 0.0
    %1180 = vmatprep.subr.mxu0 0.0
    %1181 = vmatpush1.msra.mxu0 0.0
    %1182 = vmatprep.subr.mxu0 0.0
    %1183 = vmatpush1.msra.mxu0 0.0
    %1184 = vmatprep.subr.mxu0 0.0
    %1185 = vmatpush1.msra.mxu0 0.0
    %1186 = vmatprep.subr.mxu0 0.0
    %1187 = vmatpush1.msra.mxu0 0.0
    %1188 = vmatprep.subr.mxu0 0.0
    %1189 = vmatpush1.msra.mxu0 0.0
    %1190 = vmatprep.subr.mxu0 0.0
    %1191 = vmatpush1.msra.mxu0 0.0
    %1192 = vmatprep.subr.mxu0 0.0
    %1193 = vmatpush1.msra.mxu0 0.0
    %1194 = vmatprep.subr.mxu0 0.0
    %1195 = vmatpush1.msra.mxu0 0.0
    %1196 = vmatprep.subr.mxu0 0.0
    %1197 = vmatpush1.msra.mxu0 0.0
    %1198 = vmatprep.subr.mxu0 0.0
    %1199 = vmatpush1.msra.mxu0 0.0
    %1200 = vmatprep.subr.mxu0 0.0
    %1201 = vmatpush1.msra.mxu0 0.0
    %1202 = vmatprep.subr.mxu0 0.0
    %1203 = vmatpush1.msra.mxu0 0.0
    %1204 = vmatprep.subr.mxu0 0.0
    %1205 = vmatpush1.msra.mxu0 0.0
    %1206 = vmatprep.subr.mxu0 0.0
    %1207 = vmatpush1.msra.mxu0 0.0
    %1208 = vmatprep.subr.mxu0 0.0
    %1209 = vmatpush1.msra.mxu0 0.0
    %1210 = vmatprep.mubr.f32.mxu0 0.0
    %1211 = vmatmul.mubr.f32.gmra.mrb[0].mxu0 %v1144
    %v1212 = vpop.f32.mrb[0].mxu0
    %v1213 = vadd.f32 %v1139, %v1212
    %v1214 = vpop.f32.mrb[0].mxu0
    %1215 = vdwg.mxu0
    %1216 = vst [vmem:[%s2] sm:$0xff] %v1213
    // Predicated region
    $region14: #{lstm_packed_forward.1} parent=1 // pred_check
      _
    $region15: #{lstm_packed_forward.1} parent=1 // pred_check_branch
      %1218 = sbr.rel (0) target = $region17
    $region16: #{lstm_packed_forward.1} parent=1 // pred_region
      _
    $region17: #{lstm_packed_forward.1} parent=1 // pred_fallthru
      _
    // Predicated region
    $region18: #{lstm_packed_forward.1} parent=1 // pred_check
      _
    $region19: #{lstm_packed_forward.1} parent=1 // pred_check_branch
      %1220 = sbr.rel (0) target = $region21
    $region20: #{lstm_packed_forward.1} parent=1 // pred_region
      _
    $region21: #{lstm_packed_forward.1} parent=1 // pred_fallthru
      _
    %1221 = vsyncpa [#allocation4], 1

</llo_original>
